<compile_context>
chip_gen: v6e
topology: v6e:2x2x1
jax: 0.10.0
libtpu: 0.0.40
codegen_flags: <defaults>
</compile_context>

<pallas_src>
import functools
import math

import jax
import jax.numpy as jnp
from jax.experimental import pallas as pl
from jax.experimental.pallas import tpu as pltpu

NEG_INF = -1e9


# ----------------------------- hardware-aware config ------------------------

@functools.lru_cache(maxsize=1)
def _vmem_limit_bytes():
    """Generation-aware scoped-VMEM limit (~75% of physical); safe 32 MiB fallback."""
    try:
        cap = int(pltpu.get_tpu_info().vmem_capacity_bytes)
        return max(32 * 1024 * 1024, int(cap * 0.75))
    except Exception:
        return 32 * 1024 * 1024


@functools.lru_cache(maxsize=1)
def _single_buffer_supported():
    """Feature-detect pl.Buffered(1) (single-buffered constant blocks) on this JAX/TPU."""
    if not hasattr(pl, "Buffered"):
        return False

    def _k(x_ref, w_ref, o_ref):
        o_ref[...] = x_ref[...] + w_ref[...]

    try:
        x = jnp.arange(16 * 128, dtype=jnp.float32).reshape(16, 128)
        w = jnp.ones((8, 128), jnp.float32)
        out = pl.pallas_call(
            _k,
            out_shape=jax.ShapeDtypeStruct((16, 128), jnp.float32),
            grid=(2,),
            in_specs=[
                pl.BlockSpec((8, 128), lambda i: (i, 0)),
                pl.BlockSpec((8, 128), lambda i: (0, 0), pipeline_mode=pl.Buffered(1)),
            ],
            out_specs=pl.BlockSpec((8, 128), lambda i: (i, 0)),
        )(x, w)
        return bool(jnp.allclose(jax.block_until_ready(out), x + 1.0))
    except Exception:
        return False


def _const_spec(block_shape):
    """BlockSpec for a block whose index never changes across the grid.
    Single-buffered when supported (saves the second weight buffer in VMEM)."""
    zeros = lambda *_: (0,) * len(block_shape)
    if _single_buffer_supported():
        return pl.BlockSpec(block_shape, zeros, pipeline_mode=pl.Buffered(1))
    return pl.BlockSpec(block_shape, zeros)


def _pick_tile(dim, candidates):
    """Largest candidate tile that evenly divides dim, else the full dim."""
    for c in candidates:
        if dim % c == 0:
            return c
    return dim


# ----------------------------- in-kernel helpers ----------------------------

def _layernorm(x, gamma, beta, eps):
    mean = jnp.mean(x, axis=-1, keepdims=True)
    var = jnp.mean((x - mean) ** 2, axis=-1, keepdims=True)  # biased, matches tutorial LN
    inv = jax.lax.rsqrt(var + eps)
    return (x - mean) * inv * gamma + beta


def _batched_mha(q, k, v, *, scale, causal, mask):
    """Head-batched scaled-dot-product attention.
    q: [Sq,H,dh], k/v: [Sk,H,dh] (f32).  One batched matmul per step (no per-head loop,
    no lane-unaligned per-head slices, no concatenate); causal mask built once.
    Returns lane-dense [Sq, H*dh] f32."""
    sq, h, dh = q.shape
    sk = k.shape[0]
    qh = jnp.transpose(q, (1, 0, 2)).astype(jnp.bfloat16)   # [H,Sq,dh]
    kh = jnp.transpose(k, (1, 0, 2)).astype(jnp.bfloat16)   # [H,Sk,dh]
    vh = jnp.transpose(v, (1, 0, 2)).astype(jnp.bfloat16)   # [H,Sk,dh]

    s = jnp.einsum("hqd,hkd->hqk", qh, kh,
                   preferred_element_type=jnp.float32) * scale          # [H,Sq,Sk]
    if causal:
        row = jax.lax.broadcasted_iota(jnp.int32, (sq, sk), 0)
        col = jax.lax.broadcasted_iota(jnp.int32, (sq, sk), 1)
        s = jnp.where((col <= row)[None, :, :], s, NEG_INF)             # built once, broadcast
    if mask is not None:
        s = s + mask[None, :, :]                                        # external additive mask
    m = jnp.max(s, axis=-1, keepdims=True)
    p = jnp.exp(s - m)
    denom = jnp.sum(p, axis=-1, keepdims=True)
    attn = p * pl.reciprocal(denom, approx=True)                        # EUP, not VALU divide
    out = jnp.einsum("hqk,hkd->hqd", attn.astype(jnp.bfloat16), vh,
                     preferred_element_type=jnp.float32)                # [H,Sq,dh]
    return jnp.transpose(out, (1, 0, 2)).reshape(sq, h * dh)            # [Sq, H*dh]


# --------------------- fused self-attention block kernel --------------------

def _self_attn_block_kernel(*refs, num_heads, causal, has_mask, eps, scale):
    if has_mask:
        (x_ref, wqkv_ref, bqkv_ref, wo_ref, bo_ref, g_ref, beta_ref, mask_ref, o_ref) = refs
        mask = mask_ref[...]
    else:
        (x_ref, wqkv_ref, bqkv_ref, wo_ref, bo_ref, g_ref, beta_ref, o_ref) = refs
        mask = None

    x = x_ref[0]                                                          # [S, D] f32
    s_len, d_model = x.shape
    dh = d_model // num_heads

    # weights are bf16 in HBM -> no in-kernel weight casts; f32 accumulation on the MXU.
    qkv = jnp.dot(x.astype(jnp.bfloat16), wqkv_ref[...],
                  preferred_element_type=jnp.float32) + bqkv_ref[...]     # [S, 3D]
    # [Wq | Wk | Wv] column-block weight layout (d_model-wide slices).
    # TODO(synk): importing weights that use a per-head-interleaved qkv layout requires a
    # one-time column permutation of w_qkv / b_qkv.
    q = qkv[:, :d_model].reshape(s_len, num_heads, dh)
    k = qkv[:, d_model:2 * d_model].reshape(s_len, num_heads, dh)
    v = qkv[:, 2 * d_model:].reshape(s_len, num_heads, dh)

    vals = _batched_mha(q, k, v, scale=scale, causal=causal, mask=mask)   # [S, D]
    proj = jnp.dot(vals.astype(jnp.bfloat16), wo_ref[...],
                   preferred_element_type=jnp.float32) + bo_ref[...]      # [S, D]
    o_ref[0] = _layernorm(proj + x, g_ref[...], beta_ref[...], eps).astype(o_ref.dtype)


def self_attention_block(x, p, ln_g, ln_b, num_heads, mask=None, eps=1e-5):
    """LayerNorm(x + SelfAttn(x)) fully fused; grid over batch."""
    B, S, D = x.shape
    dh = D // num_heads
    scale = 1.0 / math.sqrt(dh)
    causal = isinstance(mask, str) and mask == "causal"
    has_mask = (mask is not None) and not causal

    kern = functools.partial(_self_attn_block_kernel, num_heads=num_heads,
                             causal=causal, has_mask=has_mask, eps=eps, scale=scale)
    in_specs = [
        pl.BlockSpec((1, S, D), lambda i: (i, 0, 0)),
        _const_spec((D, 3 * D)),
        _const_spec((1, 3 * D)),
        _const_spec((D, D)),
        _const_spec((1, D)),
        _const_spec((1, D)),
        _const_spec((1, D)),
    ]
    args = [x, p["w_qkv"], p["b_qkv"].reshape(1, 3 * D), p["w_o"], p["b_o"].reshape(1, D),
            ln_g.reshape(1, D), ln_b.reshape(1, D)]
    if has_mask:
        in_specs.append(_const_spec((S, S)))
        args.append(jnp.asarray(mask, jnp.float32))

    # TODO(synk): for long sequences, tile over the query dim (flash-style) so the per-step
    # [S,S] score working set stays within v7x's 64 MiB VMEM; unnecessary at demo shapes.
    return pl.pallas_call(
        kern,
        out_shape=jax.ShapeDtypeStruct((B, S, D), jnp.float32),
        grid=(B,),
        in_specs=in_specs,
        out_specs=pl.BlockSpec((1, S, D), lambda i: (i, 0, 0)),
        compiler_params=pltpu.CompilerParams(dimension_semantics=("parallel",),
                                             vmem_limit_bytes=_vmem_limit_bytes()),
    )(*args)


# --------------------- fused cross-attention block kernel -------------------

def _cross_attn_block_kernel(*refs, num_heads, causal, has_mask, eps, scale):
    if has_mask:
        (y_ref, xe_ref, wq_ref, bq_ref, wkv_ref, bkv_ref,
         wo_ref, bo_ref, g_ref, beta_ref, mask_ref, o_ref) = refs
        mask = mask_ref[...]
    else:
        (y_ref, xe_ref, wq_ref, bq_ref, wkv_ref, bkv_ref,
         wo_ref, bo_ref, g_ref, beta_ref, o_ref) = refs
        mask = None

    y = y_ref[0]                                                          # [Sq, D]
    xe = xe_ref[0]                                                        # [Sk, D]
    sq_len, d_model = y.shape
    sk_len = xe.shape[0]
    dh = d_model // num_heads

    q2d = jnp.dot(y.astype(jnp.bfloat16), wq_ref[...],
                  preferred_element_type=jnp.float32) + bq_ref[...]       # [Sq, D]
    kv = jnp.dot(xe.astype(jnp.bfloat16), wkv_ref[...],
                 preferred_element_type=jnp.float32) + bkv_ref[...]       # [Sk, 2D]
    q = q2d.reshape(sq_len, num_heads, dh)
    k = kv[:, :d_model].reshape(sk_len, num_heads, dh)                    # [Wk | Wv] layout
    v = kv[:, d_model:].reshape(sk_len, num_heads, dh)

    vals = _batched_mha(q, k, v, scale=scale, causal=causal, mask=mask)
    proj = jnp.dot(vals.astype(jnp.bfloat16), wo_ref[...],
                   preferred_element_type=jnp.float32) + bo_ref[...]
    o_ref[0] = _layernorm(proj + y, g_ref[...], beta_ref[...], eps).astype(o_ref.dtype)


def cross_attention_block(x_enc, y, p, ln_g, ln_b, num_heads, mask=None, eps=1e-5):
    """LayerNorm(y + CrossAttn(q=y, kv=x_enc)) fully fused; grid over batch."""
    B, Sq, D = y.shape
    Sk = x_enc.shape[1]
    dh = D // num_heads
    scale = 1.0 / math.sqrt(dh)
    causal = isinstance(mask, str) and mask == "causal"
    has_mask = (mask is not None) and not causal

    kern = functools.partial(_cross_attn_block_kernel, num_heads=num_heads,
                             causal=causal, has_mask=has_mask, eps=eps, scale=scale)
    in_specs = [
        pl.BlockSpec((1, Sq, D), lambda i: (i, 0, 0)),
        pl.BlockSpec((1, Sk, D), lambda i: (i, 0, 0)),
        _const_spec((D, D)),
        _const_spec((1, D)),
        _const_spec((D, 2 * D)),
        _const_spec((1, 2 * D)),
        _const_spec((D, D)),
        _const_spec((1, D)),
        _const_spec((1, D)),
        _const_spec((1, D)),
    ]
    args = [y, x_enc, p["w_q"], p["b_q"].reshape(1, D), p["w_kv"], p["b_kv"].reshape(1, 2 * D),
            p["w_o"], p["b_o"].reshape(1, D), ln_g.reshape(1, D), ln_b.reshape(1, D)]
    if has_mask:
        in_specs.append(_const_spec((Sq, Sk)))
        args.append(jnp.asarray(mask, jnp.float32))

    return pl.pallas_call(
        kern,
        out_shape=jax.ShapeDtypeStruct((B, Sq, D), jnp.float32),
        grid=(B,),
        in_specs=in_specs,
        out_specs=pl.BlockSpec((1, Sq, D), lambda i: (i, 0, 0)),
        compiler_params=pltpu.CompilerParams(dimension_semantics=("parallel",),
                                             vmem_limit_bytes=_vmem_limit_bytes()),
    )(*args)


# ------------------------- fused FFN block kernel ---------------------------

def _ffn_block_kernel(x_ref, w1_ref, b1_ref, w2_ref, b2_ref, g_ref, beta_ref, o_ref, *, eps):
    x = x_ref[...]                                                        # [tm, D] f32
    h = jnp.dot(x.astype(jnp.bfloat16), w1_ref[...],
                preferred_element_type=jnp.float32) + b1_ref[...]
    h = jnp.maximum(h, 0.0)
    y = jnp.dot(h.astype(jnp.bfloat16), w2_ref[...],
                preferred_element_type=jnp.float32) + b2_ref[...]
    o_ref[...] = _layernorm(y + x, g_ref[...], beta_ref[...], eps).astype(o_ref.dtype)


def ffn_block(x2d, p, ln_g, ln_b, eps=1e-5):
    """LayerNorm(x + W2·relu(W1·x + b1) + b2) fused; tiled/pipelined over rows."""
    M, D = x2d.shape
    F = p["w1"].shape[1]
    tm = _pick_tile(M, (1024, 768, 512, 256, 128, 64, 32, 16, 8))
    # TODO(synk): for very large ffn_hidden, tile over F with an accumulator instead of
    # holding both full weight matrices resident (matters under v7x's 64 MiB VMEM).
    kern = functools.partial(_ffn_block_kernel, eps=eps)
    return pl.pallas_call(
        kern,
        out_shape=jax.ShapeDtypeStruct((M, D), jnp.float32),
        grid=(M // tm,),
        in_specs=[
            pl.BlockSpec((tm, D), lambda i: (i, 0)),
            _const_spec((D, F)),
            _const_spec((1, F)),
            _const_spec((F, D)),
            _const_spec((1, D)),
            _const_spec((1, D)),
            _const_spec((1, D)),
        ],
        out_specs=pl.BlockSpec((tm, D), lambda i: (i, 0)),
        compiler_params=pltpu.CompilerParams(dimension_semantics=("parallel",),
                                             vmem_limit_bytes=_vmem_limit_bytes()),
    )(x2d, p["w1"], p["b1"].reshape(1, F), p["w2"], p["b2"].reshape(1, D),
      ln_g.reshape(1, D), ln_b.reshape(1, D))


# ----------------------- tiled linear (vocab projection) --------------------

def _linear_kernel(x_ref, w_ref, b_ref, o_ref, acc_ref):
    @pl.when(pl.program_id(2) == 0)
    def _():
        acc_ref[...] = jnp.zeros_like(acc_ref)

    acc_ref[...] += jnp.dot(x_ref[...].astype(jnp.bfloat16), w_ref[...],
                            preferred_element_type=jnp.float32)

    @pl.when(pl.program_id(2) == pl.num_programs(2) - 1)
    def _():
        o_ref[...] = (acc_ref[...] + b_ref[...]).astype(o_ref.dtype)


def linear(x2d, w, b):
    """out = x2d @ w + b. Tiled accumulator matmul; N padded to a 128-multiple so output
    stores are lane-dense (unmasked vst), padding sliced off afterwards."""
    M, K = x2d.shape
    N = w.shape[1]
    n_pad = (-N) % 128
    if n_pad:
        w = jnp.pad(w, ((0, 0), (0, n_pad)))
        b = jnp.pad(b, ((0, n_pad),))
    Np = N + n_pad

    tm = _pick_tile(M, (1024, 768, 512, 256, 128, 64, 32, 16, 8))
    tk = _pick_tile(K, (1024, 768, 512, 256, 128))
    tn = _pick_tile(Np, (1024, 768, 512, 256, 128))

    out = pl.pallas_call(
        _linear_kernel,
        out_shape=jax.ShapeDtypeStruct((M, Np), jnp.float32),
        grid=(M // tm, Np // tn, K // tk),
        in_specs=[
            pl.BlockSpec((tm, tk), lambda i, j, k: (i, k)),
            pl.BlockSpec((tk, tn), lambda i, j, k: (k, j)),
            pl.BlockSpec((1, tn), lambda i, j, k: (0, j)),
        ],
        out_specs=pl.BlockSpec((tm, tn), lambda i, j, k: (i, j)),
        scratch_shapes=[pltpu.VMEM((tm, tn), jnp.float32)],
        compiler_params=pltpu.CompilerParams(
            dimension_semantics=("parallel", "parallel", "arbitrary"),
            vmem_limit_bytes=_vmem_limit_bytes()),
    )(x2d, w, b.reshape(1, Np))
    return out[:, :N] if n_pad else out


# ------------------------------ model (glue) -------------------------------

def sinusoidal_positional_encoding(seq_len, d_model):
    even_i = jnp.arange(0, d_model, 2, dtype=jnp.float32)
    denom = jnp.power(10000.0, even_i / d_model)
    pos = jnp.arange(seq_len, dtype=jnp.float32).reshape(seq_len, 1)
    even_pe = jnp.sin(pos / denom)
    odd_pe = jnp.cos(pos / denom)
    return jnp.stack([even_pe, odd_pe], axis=2).reshape(seq_len, d_model)


def sentence_embed(token_ids, emb_table, pe):
    # TODO(synk): string tokenization / start-end token insertion of SentenceTokenizer is
    # host-side python; the kernel path starts from integer token ids.
    x = jnp.take(emb_table, token_ids, axis=0)        # [B, S, D] embedding gather (glue)
    return x + pe[None, :, :]                         # dropout == identity (eval)


def encoder_layer(x, p, num_heads, mask=None):
    x = self_attention_block(x, p["attn"], p["ln1_g"], p["ln1_b"], num_heads, mask)
    B, S, D = x.shape
    x = ffn_block(x.reshape(B * S, D), p["ffn"], p["ln2_g"], p["ln2_b"]).reshape(B, S, D)
    return x


def decoder_layer(x_enc, y, p, num_heads, self_mask=None, cross_mask=None):
    y = self_attention_block(y, p["self_attn"], p["ln1_g"], p["ln1_b"], num_heads, self_mask)
    y = cross_attention_block(x_enc, y, p["cross_attn"], p["ln2_g"], p["ln2_b"],
                              num_heads, cross_mask)
    B, S, D = y.shape
    y = ffn_block(y.reshape(B * S, D), p["ffn"], p["ln3_g"], p["ln3_b"]).reshape(B, S, D)
    return y


def transformer_forward(params, cfg, x_ids, y_ids,
                        encoder_self_attention_mask=None,
                        decoder_self_attention_mask=None,
                        decoder_cross_attention_mask=None):
    H = cfg["num_heads"]
    pe = sinusoidal_positional_encoding(cfg["max_seq"], cfg["d_model"])
    x = sentence_embed(x_ids, params["src_emb"], pe)
    y = sentence_embed(y_ids, params["tgt_emb"], pe)
    for lp in params["encoder"]:
        x = encoder_layer(x, lp, H, encoder_self_attention_mask)
    for lp in params["decoder"]:
        y = decoder_layer(x, y, lp, H,
                          self_mask=decoder_self_attention_mask,
                          cross_mask=decoder_cross_attention_mask)
    B, S, D = y.shape
    out = linear(y.reshape(B * S, D), params["w_out"], params["b_out"])
    return out.reshape(B, S, cfg["vocab_size"])


# ------------------------------ parameters ---------------------------------

def init_params(key, cfg):
    d, h, v = cfg["d_model"], cfg["ffn_hidden"], cfg["vocab_size"]
    keys = iter(jax.random.split(key, 512))

    def dense(fan_in, fan_out):
        # weights live in HBM as bf16 (halves DMA bytes / VMEM), f32 accumulation in-kernel
        w = jax.random.normal(next(keys), (fan_in, fan_out), jnp.float32) * 0.02
        return w.astype(jnp.bfloat16)

    def self_attn():
        # [Wq | Wk | Wv] column-block layout (d_model-wide blocks)
        return dict(w_qkv=dense(d, 3 * d), b_qkv=jnp.zeros((3 * d,), jnp.float32),
                    w_o=dense(d, d), b_o=jnp.zeros((d,), jnp.float32))

    def cross_attn():
        # [Wk | Wv] column-block layout
        return dict(w_kv=dense(d, 2 * d), b_kv=jnp.zeros((2 * d,), jnp.float32),
                    w_q=dense(d, d), b_q=jnp.zeros((d,), jnp.float32),
                    w_o=dense(d, d), b_o=jnp.zeros((d,), jnp.float32))

    def ffn():
        return dict(w1=dense(d, h), b1=jnp.zeros((h,), jnp.float32),
                    w2=dense(h, d), b2=jnp.zeros((d,), jnp.float32))

    enc_layers = [dict(attn=self_attn(), ffn=ffn(),
                       ln1_g=jnp.ones((d,), jnp.float32), ln1_b=jnp.zeros((d,), jnp.float32),
                       ln2_g=jnp.ones((d,), jnp.float32), ln2_b=jnp.zeros((d,), jnp.float32))
                  for _ in range(cfg["num_layers"])]
    dec_layers = [dict(self_attn=self_attn(), cross_attn=cross_attn(), ffn=ffn(),
                       ln1_g=jnp.ones((d,), jnp.float32), ln1_b=jnp.zeros((d,), jnp.float32),
                       ln2_g=jnp.ones((d,), jnp.float32), ln2_b=jnp.zeros((d,), jnp.float32),
                       ln3_g=jnp.ones((d,), jnp.float32), ln3_b=jnp.zeros((d,), jnp.float32))
                  for _ in range(cfg["num_layers"])]

    return dict(
        src_emb=jax.random.normal(next(keys), (v, d), jnp.float32) * 0.02,
        tgt_emb=jax.random.normal(next(keys), (v, d), jnp.float32) * 0.02,
        encoder=enc_layers,
        decoder=dec_layers,
        w_out=dense(d, v),
        b_out=jnp.zeros((v,), jnp.float32),
    )


# --------------------------------- main -------------------------------------

if __name__ == "__main__":
    cfg = dict(d_model=32, ffn_hidden=64, num_heads=4, num_layers=2,
               vocab_size=48, max_seq=8, drop_prob=0.1)

    key = jax.random.PRNGKey(0)
    k_params, k_x, k_y = jax.random.split(key, 3)
    params = init_params(k_params, cfg)

    B, S = 2, cfg["max_seq"]
    x_ids = jax.random.randint(k_x, (B, S), 0, cfg["vocab_size"], dtype=jnp.int32)
    y_ids = jax.random.randint(k_y, (B, S), 0, cfg["vocab_size"], dtype=jnp.int32)

    # decoder self-attention uses a causal (look-ahead) mask generated in-kernel via iota
    out = transformer_forward(params, cfg, x_ids, y_ids,
                              encoder_self_attention_mask=None,
                              decoder_self_attention_mask="causal",
                              decoder_cross_attention_mask=None)
    out = jax.block_until_ready(out)

    assert out.shape == (B, S, cfg["vocab_size"]), out.shape
    assert bool(jnp.all(jnp.isfinite(out)))
    print("KERNEL_OK")
</pallas_src>

<mosaic_0001>
module attributes {stable_mosaic.version = 11 : i64} {
  func.func @_k(%arg0: i32, %arg1: memref<8x128xf32, #tpu.memory_space<vmem>>, %arg2: memref<8x128xf32, #tpu.memory_space<vmem>>, %arg3: memref<8x128xf32, #tpu.memory_space<vmem>>) attributes {dimension_semantics = [#tpu.dimension_semantics<arbitrary>], iteration_bounds = array<i64: 2>, scalar_prefetch = 0 : i64, scratch_operands = 0 : i64, tpu.core_type = #tpu.core_type<tc>, window_params = [{transform_indices = @transform_0, window_bounds = array<i64: 8, 128>}, {pipeline_mode = #tpu.pipeline_mode<synchronous>, transform_indices = @transform_1, window_bounds = array<i64: 8, 128>}, {transform_indices = @transform_2, window_bounds = array<i64: 8, 128>}]} {
    %c0 = arith.constant 0 : index
    %c0_0 = arith.constant 0 : index
    %0 = vector.load %arg1[%c0, %c0_0] : memref<8x128xf32, #tpu.memory_space<vmem>>, vector<8x128xf32>
    %c0_1 = arith.constant 0 : index
    %c0_2 = arith.constant 0 : index
    %1 = vector.load %arg2[%c0_1, %c0_2] : memref<8x128xf32, #tpu.memory_space<vmem>>, vector<8x128xf32>
    %2 = arith.addf %0, %1 : vector<8x128xf32>
    %c0_3 = arith.constant 0 : index
    %c0_4 = arith.constant 0 : index
    %3 = vector.load %arg3[%c0_3, %c0_4] : memref<8x128xf32, #tpu.memory_space<vmem>>, vector<8x128xf32>
    tpu.vector_store %arg3[%c0_3, %c0_4], %2 {strides = array<i32>} : memref<8x128xf32, #tpu.memory_space<vmem>>, vector<8x128xf32>,
    return
  }
  func.func @transform_0(%arg0: i32) -> (i32, i32) {
    %c0_i32 = arith.constant 0 : i32
    %c0_i32_0 = arith.constant 0 : i32
    return %arg0, %c0_i32 : i32, i32
  }
  func.func @transform_1(%arg0: i32) -> (i32, i32) {
    %c0_i32 = arith.constant 0 : i32
    %c0_i32_0 = arith.constant 0 : i32
    %c0_i32_1 = arith.constant 0 : i32
    return %c0_i32, %c0_i32_0 : i32, i32
  }
  func.func @transform_2(%arg0: i32) -> (i32, i32) {
    %c0_i32 = arith.constant 0 : i32
    %c0_i32_0 = arith.constant 0 : i32
    return %arg0, %c0_i32 : i32, i32
  }
}

module attributes {stable_mosaic.version = 11 : i64} {
  func.func @_self_attn_block_kernel(%arg0: i32, %arg1: memref<1x8x32xf32, #tpu.memory_space<vmem>>, %arg2: memref<32x96xbf16, #tpu.memory_space<vmem>>, %arg3: memref<1x96xf32, #tpu.memory_space<vmem>>, %arg4: memref<32x32xbf16, #tpu.memory_space<vmem>>, %arg5: memref<1x32xf32, #tpu.memory_space<vmem>>, %arg6: memref<1x32xf32, #tpu.memory_space<vmem>>, %arg7: memref<1x32xf32, #tpu.memory_space<vmem>>, %arg8: memref<1x8x32xf32, #tpu.memory_space<vmem>>) attributes {dimension_semantics = [#tpu.dimension_semantics<parallel>], iteration_bounds = array<i64: 2>, scalar_prefetch = 0 : i64, scratch_operands = 0 : i64, tpu.core_type = #tpu.core_type<tc>, window_params = [{transform_indices = @transform_0, window_bounds = array<i64: 1, 8, 32>}, {pipeline_mode = #tpu.pipeline_mode<synchronous>, transform_indices = @transform_1, window_bounds = array<i64: 32, 96>}, {pipeline_mode = #tpu.pipeline_mode<synchronous>, transform_indices = @transform_2, window_bounds = array<i64: 1, 96>}, {pipeline_mode = #tpu.pipeline_mode<synchronous>, transform_indices = @transform_3, window_bounds = array<i64: 32, 32>}, {pipeline_mode = #tpu.pipeline_mode<synchronous>, transform_indices = @transform_4, window_bounds = array<i64: 1, 32>}, {pipeline_mode = #tpu.pipeline_mode<synchronous>, transform_indices = @transform_5, window_bounds = array<i64: 1, 32>}, {pipeline_mode = #tpu.pipeline_mode<synchronous>, transform_indices = @transform_6, window_bounds = array<i64: 1, 32>}, {transform_indices = @transform_7, window_bounds = array<i64: 1, 8, 32>}]} {
    %c0 = arith.constant 0 : index
    %c0_0 = arith.constant 0 : index
    %c0_1 = arith.constant 0 : index
    %0 = vector.load %arg1[%c0, %c0_0, %c0_1] : memref<1x8x32xf32, #tpu.memory_space<vmem>>, vector<1x8x32xf32>
    %1 = vector.shape_cast %0 : vector<1x8x32xf32> to vector<8x32xf32>
    %2 = arith.truncf %1 : vector<8x32xf32> to vector<8x32xbf16>
    %c0_2 = arith.constant 0 : index
    %c0_3 = arith.constant 0 : index
    %3 = vector.load %arg2[%c0_2, %c0_3] : memref<32x96xbf16, #tpu.memory_space<vmem>>, vector<32x96xbf16>
    %cst = arith.constant dense<0.000000e+00> : vector<8x96xf32>
    %4 = tpu.matmul %2, %3, %cst {dimension_numbers = #tpu.dot_dimension_numbers<[1], [0], [0], [1], [0, 0, 1, 1], [], []>} : vector<8x32xbf16>, vector<32x96xbf16>, vector<8x96xf32> -> vector<8x96xf32>
    %c0_4 = arith.constant 0 : index
    %c0_5 = arith.constant 0 : index
    %5 = vector.load %arg3[%c0_4, %c0_5] : memref<1x96xf32, #tpu.memory_space<vmem>>, vector<1x96xf32>
    %6 = vector.broadcast %5 : vector<1x96xf32> to vector<8x96xf32>
    %7 = arith.addf %4, %6 : vector<8x96xf32>
    %8 = vector.extract_strided_slice %7 {offsets = [0, 0], sizes = [8, 32], strides = [1, 1]} : vector<8x96xf32> to vector<8x32xf32>
    %9 = vector.shape_cast %8 : vector<8x32xf32> to vector<8x4x8xf32>
    %10 = vector.extract_strided_slice %7 {offsets = [0, 32], sizes = [8, 32], strides = [1, 1]} : vector<8x96xf32> to vector<8x32xf32>
    %11 = vector.shape_cast %10 : vector<8x32xf32> to vector<8x4x8xf32>
    %12 = vector.extract_strided_slice %7 {offsets = [0, 64], sizes = [8, 32], strides = [1, 1]} : vector<8x96xf32> to vector<8x32xf32>
    %13 = vector.shape_cast %12 : vector<8x32xf32> to vector<8x4x8xf32>
    %14 = tpu.transpose %9, [1, 0, 2] : vector<8x4x8xf32> -> vector<4x8x8xf32>
    %15 = arith.truncf %14 : vector<4x8x8xf32> to vector<4x8x8xbf16>
    %16 = tpu.transpose %11, [1, 0, 2] : vector<8x4x8xf32> -> vector<4x8x8xf32>
    %17 = arith.truncf %16 : vector<4x8x8xf32> to vector<4x8x8xbf16>
    %18 = tpu.transpose %13, [1, 0, 2] : vector<8x4x8xf32> -> vector<4x8x8xf32>
    %19 = arith.truncf %18 : vector<4x8x8xf32> to vector<4x8x8xbf16>
    "tpu.trace_start"() <{level = 10 : i32, message = "hqd,hkd->hqk"}> : () -> ()
    %cst_6 = arith.constant dense<0.000000e+00> : vector<4x8x8xf32>
    %20 = tpu.matmul %15, %17, %cst_6 {dimension_numbers = #tpu.dot_dimension_numbers<[2], [2], [1], [1], [0, 0, 0, 1, 1, 1], [0], [0]>} : vector<4x8x8xbf16>, vector<4x8x8xbf16>, vector<4x8x8xf32> -> vector<4x8x8xf32>
    "tpu.trace_stop"() : () -> ()
    %cst_7 = arith.constant 0.353553385 : f32
    %21 = vector.broadcast %cst_7 : f32 to vector<4x8x8xf32>
    %22 = arith.mulf %20, %21 : vector<4x8x8xf32>
    %cst_8 = arith.constant dense<0xFF800000> : vector<4x8xf32>
    %23 = vector.multi_reduction <maximumf>, %22, %cst_8 [2] : vector<4x8x8xf32> to vector<4x8xf32>
    %24 = vector.shape_cast %23 : vector<4x8xf32> to vector<4x8x1xf32>
    %25 = vector.broadcast %24 : vector<4x8x1xf32> to vector<4x8x8xf32>
    %26 = arith.subf %22, %25 : vector<4x8x8xf32>
    %27 = math.exp %26 : vector<4x8x8xf32>
    %cst_9 = arith.constant dense<0.000000e+00> : vector<4x8xf32>
    %28 = vector.multi_reduction <add>, %27, %cst_9 [2] : vector<4x8x8xf32> to vector<4x8xf32>
    %29 = vector.shape_cast %28 : vector<4x8xf32> to vector<4x8x1xf32>
    %30 = tpu.reciprocal %29 {approx = true} : vector<4x8x1xf32> -> vector<4x8x1xf32>
    %31 = vector.broadcast %30 : vector<4x8x1xf32> to vector<4x8x8xf32>
    %32 = arith.mulf %27, %31 : vector<4x8x8xf32>
    %33 = arith.truncf %32 : vector<4x8x8xf32> to vector<4x8x8xbf16>
    "tpu.trace_start"() <{level = 10 : i32, message = "hqk,hkd->hqd"}> : () -> ()
    %cst_10 = arith.constant dense<0.000000e+00> : vector<4x8x8xf32>
    %34 = tpu.matmul %33, %19, %cst_10 {dimension_numbers = #tpu.dot_dimension_numbers<[2], [1], [1], [2], [0, 0, 0, 1, 1, 2], [0], [0]>} : vector<4x8x8xbf16>, vector<4x8x8xbf16>, vector<4x8x8xf32> -> vector<4x8x8xf32>
    "tpu.trace_stop"() : () -> ()
    %35 = tpu.transpose %34, [1, 0, 2] : vector<4x8x8xf32> -> vector<8x4x8xf32>
    %36 = vector.shape_cast %35 : vector<8x4x8xf32> to vector<8x32xf32>
    %37 = arith.truncf %36 : vector<8x32xf32> to vector<8x32xbf16>
    %c0_11 = arith.constant 0 : index
    %c0_12 = arith.constant 0 : index
    %38 = vector.load %arg4[%c0_11, %c0_12] : memref<32x32xbf16, #tpu.memory_space<vmem>>, vector<32x32xbf16>
    %cst_13 = arith.constant dense<0.000000e+00> : vector<8x32xf32>
    %39 = tpu.matmul %37, %38, %cst_13 {dimension_numbers = #tpu.dot_dimension_numbers<[1], [0], [0], [1], [0, 0, 1, 1], [], []>} : vector<8x32xbf16>, vector<32x32xbf16>, vector<8x32xf32> -> vector<8x32xf32>
    %c0_14 = arith.constant 0 : index
    %c0_15 = arith.constant 0 : index
    %40 = vector.load %arg5[%c0_14, %c0_15] : memref<1x32xf32, #tpu.memory_space<vmem>>, vector<1x32xf32>
    %41 = vector.broadcast %40 : vector<1x32xf32> to vector<8x32xf32>
    %42 = arith.addf %39, %41 : vector<8x32xf32>
    %43 = arith.addf %42, %1 : vector<8x32xf32>
    %c0_16 = arith.constant 0 : index
    %c0_17 = arith.constant 0 : index
    %44 = vector.load %arg6[%c0_16, %c0_17] : memref<1x32xf32, #tpu.memory_space<vmem>>, vector<1x32xf32>
    %c0_18 = arith.constant 0 : index
    %c0_19 = arith.constant 0 : index
    %45 = vector.load %arg7[%c0_18, %c0_19] : memref<1x32xf32, #tpu.memory_space<vmem>>, vector<1x32xf32>
    %cst_20 = arith.constant dense<0.000000e+00> : vector<8xf32>
    %46 = vector.multi_reduction <add>, %43, %cst_20 [1] : vector<8x32xf32> to vector<8xf32>
    %47 = vector.shape_cast %46 : vector<8xf32> to vector<8x1xf32>
    %cst_21 = arith.constant 3.200000e+01 : f32
    %48 = vector.broadcast %cst_21 : f32 to vector<8x1xf32>
    %49 = arith.divf %47, %48 : vector<8x1xf32>
    %50 = vector.broadcast %49 : vector<8x1xf32> to vector<8x32xf32>
    %51 = arith.subf %43, %50 : vector<8x32xf32>
    %52 = arith.mulf %51, %51 : vector<8x32xf32>
    %cst_22 = arith.constant dense<0.000000e+00> : vector<8xf32>
    %53 = vector.multi_reduction <add>, %52, %cst_22 [1] : vector<8x32xf32> to vector<8xf32>
    %54 = vector.shape_cast %53 : vector<8xf32> to vector<8x1xf32>
    %cst_23 = arith.constant 3.200000e+01 : f32
    %55 = vector.broadcast %cst_23 : f32 to vector<8x1xf32>
    %56 = arith.divf %54, %55 : vector<8x1xf32>
    %cst_24 = arith.constant 9.99999974E-6 : f32
    %57 = vector.broadcast %cst_24 : f32 to vector<8x1xf32>
    %58 = arith.addf %56, %57 : vector<8x1xf32>
    %59 = math.rsqrt %58 : vector<8x1xf32>
    %60 = vector.broadcast %49 : vector<8x1xf32> to vector<8x32xf32>
    %61 = arith.subf %43, %60 : vector<8x32xf32>
    %62 = vector.broadcast %59 : vector<8x1xf32> to vector<8x32xf32>
    %63 = arith.mulf %61, %62 : vector<8x32xf32>
    %64 = vector.broadcast %44 : vector<1x32xf32> to vector<8x32xf32>
    %65 = arith.mulf %63, %64 : vector<8x32xf32>
    %66 = vector.broadcast %45 : vector<1x32xf32> to vector<8x32xf32>
    %67 = arith.addf %65, %66 : vector<8x32xf32>
    %c0_25 = arith.constant 0 : index
    %c0_26 = arith.constant 0 : index
    %c0_27 = arith.constant 0 : index
    %68 = vector.load %arg8[%c0_25, %c0_26, %c0_27] : memref<1x8x32xf32, #tpu.memory_space<vmem>>, vector<1x8x32xf32>
    %69 = vector.shape_cast %68 : vector<1x8x32xf32> to vector<8x32xf32>
    %70 = vector.shape_cast %67 : vector<8x32xf32> to vector<1x8x32xf32>
    tpu.vector_store %arg8[%c0_25, %c0_26, %c0_27], %70 {strides = array<i32>} : memref<1x8x32xf32, #tpu.memory_space<vmem>>, vector<1x8x32xf32>,
    return
  }
  func.func @transform_0(%arg0: i32) -> (i32, i32, i32) {
    %c0_i32 = arith.constant 0 : i32
    %c0_i32_0 = arith.constant 0 : i32
    %c0_i32_1 = arith.constant 0 : i32
    return %arg0, %c0_i32, %c0_i32_0 : i32, i32, i32
  }
  func.func @transform_1(%arg0: i32) -> (i32, i32) {
    %c0_i32 = arith.constant 0 : i32
    %c0_i32_0 = arith.constant 0 : i32
    %c0_i32_1 = arith.constant 0 : i32
    return %c0_i32, %c0_i32_0 : i32, i32
  }
  func.func @transform_2(%arg0: i32) -> (i32, i32) {
    %c0_i32 = arith.constant 0 : i32
    %c0_i32_0 = arith.constant 0 : i32
    %c0_i32_1 = arith.constant 0 : i32
    return %c0_i32, %c0_i32_0 : i32, i32
  }
  func.func @transform_3(%arg0: i32) -> (i32, i32) {
    %c0_i32 = arith.constant 0 : i32
    %c0_i32_0 = arith.constant 0 : i32
    %c0_i32_1 = arith.constant 0 : i32
    return %c0_i32, %c0_i32_0 : i32, i32
  }
  func.func @transform_4(%arg0: i32) -> (i32, i32) {
    %c0_i32 = arith.constant 0 : i32
    %c0_i32_0 = arith.constant 0 : i32
    %c0_i32_1 = arith.constant 0 : i32
    return %c0_i32, %c0_i32_0 : i32, i32
  }
  func.func @transform_5(%arg0: i32) -> (i32, i32) {
    %c0_i32 = arith.constant 0 : i32
    %c0_i32_0 = arith.constant 0 : i32
    %c0_i32_1 = arith.constant 0 : i32
    return %c0_i32, %c0_i32_0 : i32, i32
  }
  func.func @transform_6(%arg0: i32) -> (i32, i32) {
    %c0_i32 = arith.constant 0 : i32
    %c0_i32_0 = arith.constant 0 : i32
    %c0_i32_1 = arith.constant 0 : i32
    return %c0_i32, %c0_i32_0 : i32, i32
  }
  func.func @transform_7(%arg0: i32) -> (i32, i32, i32) {
    %c0_i32 = arith.constant 0 : i32
    %c0_i32_0 = arith.constant 0 : i32
    %c0_i32_1 = arith.constant 0 : i32
    return %arg0, %c0_i32, %c0_i32_0 : i32, i32, i32
  }
}

</mosaic_0001>

<llo_original>
// kernel: tpu_custom_call.1
$region0: #{tpu_custom_call.1}
  #allocation0 [shape = 'u32[]', space=smem, size = 0x4, offset = 0x4, fixed_abs, tag = 'smem constant byte address 0x4 - core index']
  #allocation1 [shape = 'u32[144,128]{1,0:T(1,128)}', space=vmem, size = 0x12000, scoped, tag = 'internal scratch']
  %s0 = inlined_call_operand.hbm [shape: f32[16,128], index: 0, kind: input, shape index: {}]
  %s1 = inlined_call_operand.hbm [shape: f32[8,128], index: 1, kind: input, shape index: {}]
  %s2 = inlined_call_operand.hbm [shape: f32[16,128], index: 2, kind: output, shape index: {}]
  %s3 = sld [smem:[#allocation0]]
  $region49: #{tpu_custom_call.1} parent=0
    _
  %s5 = ssub.s32 1, %s3
  %s6 = scalar_select 0, %s5, %s3
  $region1: #{tpu_custom_call.1} parent=0
    #allocation2 [shape = 'u8[8192]{0}', space=vmem, size = 0x2000, scoped, tag = 'input window, operand 0']
    #allocation3 [shape = 's32[2]{0}', space=sflag, size = 0x8, scoped, tag = 'scoped memory for tpu_custom_call.1']
    #allocation4 [shape = 's32[2]{0}', space=sflag, size = 0x8, scoped, tag = 'scoped memory for tpu_custom_call.1']
    #allocation5 [shape = 'u8[4096]{0}', space=vmem, size = 0x1000, scoped, tag = 'input window, operand 1, single buffered']
    #allocation6 [shape = 's32[1]{0}', space=sflag, size = 0x4, scoped, tag = 'scoped memory for tpu_custom_call.1']
    #allocation7 [shape = 'u8[8192]{0}', space=vmem, size = 0x2000, scoped, tag = 'output window, operand 0']
    %7 = vsyncpa [#allocation3], 0
    %s8 = scalar_lea.sflag [#allocation3], 1
    %9 = vsyncpa %s8, 0
    %10 = vsyncpa [#allocation6], 0
    %11 = vsyncpa [#allocation4], 0
    %s12 = scalar_lea.sflag [#allocation4], 1
    %13 = vsyncpa %s12, 0
    loop: start=0, step=1, limit=4
    $region2: #{tpu_custom_call.1} parent=1 // loop_pre_header
      _
    $region3: #{tpu_custom_call.1} parent=1 // loop_header
      %s15 = sphi 0, %s19
      %p16 = scmp.ge.s32.totalorder %s15, 4
      %s25 = sphi 0, %s27
      %s28 = sphi 0, %s25
      %s29 = sphi 0, %s28
      %s45 = sphi 0, %s29
      %s49 = sphi 0, %s49
      %s51 = sphi 0, %s49
      %s52 = sphi 0, %s51
      %s66 = sphi 0, %s52
      %s72 = sphi 0, %s74
      %s75 = sphi 0, %s72
      %s76 = sphi 0, %s75
      %s92 = sphi 0, %s76
    $region4: #{tpu_custom_call.1} parent=1 // loop_header_branch
      %18 = sbr.rel (%p16) target = $region8
    $region5: #{tpu_custom_call.1} parent=1 // loop_body
      %s20 = ssub.s32 %s15, 1
      %s21 = ssub.s32 %s15, 2
      %s22 = sadd.s32 %s15, 1
      %s23 = ssub.s32 %s15, %s22
      %p24 = scmp.eq.s32.totalorder %s23, 0
      %s26 = sadd.s32 %s25, 1
      %s27 = scalar_select %p24, %s25, %s26
      %p30 = pneg %p24
      %p31 = scmp.eq.s32.totalorder %s15, 1
      %p32 = por %p30, %p31
      %p33 = scmp.ne.s32.totalorder %s25, %s28
      %p34 = scmp.eq.s32.totalorder %s15, 0
      %p35 = por %p33, %p34
      %p36 = scmp.ne.s32.totalorder %s25, %s28
      %p37 = scmp.eq.s32.totalorder %s20, 1
      %p38 = por %p36, %p37
      %p39 = scmp.ne.s32.totalorder %s28, %s29
      %p40 = scmp.eq.s32.totalorder %s20, 0
      %p41 = por %p39, %p40
      %p42 = scmp.ne.s32.totalorder %s28, %s29
      %p43 = scmp.eq.s32.totalorder %s21, 1
      %p44 = por %p42, %p43
      %p46 = scmp.ne.s32.totalorder %s29, %s45
      %p47 = scmp.eq.s32.totalorder %s21, 0
      %p48 = por %p46, %p47
      %s50 = sadd.s32 %s49, 1
      %p53 = scmp.eq.s32.totalorder %s15, 1
      %p54 = scmp.ne.s32.totalorder %s49, %s51
      %p55 = scmp.eq.s32.totalorder %s15, 0
      %p56 = por %p54, %p55
      %p57 = scmp.ne.s32.totalorder %s49, %s51
      %p58 = scmp.eq.s32.totalorder %s20, 1
      %p59 = por %p57, %p58
      %p60 = scmp.ne.s32.totalorder %s51, %s52
      %p61 = scmp.eq.s32.totalorder %s20, 0
      %p62 = por %p60, %p61
      %p63 = scmp.ne.s32.totalorder %s51, %s52
      %p64 = scmp.eq.s32.totalorder %s21, 1
      %p65 = por %p63, %p64
      %p67 = scmp.ne.s32.totalorder %s52, %s66
      %p68 = scmp.eq.s32.totalorder %s21, 0
      %p69 = por %p67, %p68
      %s70 = ssub.s32 %s15, %s22
      %p71 = scmp.eq.s32.totalorder %s70, 0
      %s73 = sadd.s32 %s72, 1
      %s74 = scalar_select %p71, %s72, %s73
      %p77 = pneg %p71
      %p78 = scmp.eq.s32.totalorder %s15, 1
      %p79 = por %p77, %p78
      %p80 = scmp.ne.s32.totalorder %s72, %s75
      %p81 = scmp.eq.s32.totalorder %s15, 0
      %p82 = por %p80, %p81
      %p83 = scmp.ne.s32.totalorder %s72, %s75
      %p84 = scmp.eq.s32.totalorder %s20, 1
      %p85 = por %p83, %p84
      %p86 = scmp.ne.s32.totalorder %s75, %s76
      %p87 = scmp.eq.s32.totalorder %s20, 0
      %p88 = por %p86, %p87
      %p89 = scmp.ne.s32.totalorder %s75, %s76
      %p90 = scmp.eq.s32.totalorder %s21, 1
      %p91 = por %p89, %p90
      %p93 = scmp.ne.s32.totalorder %s76, %s92
      %p94 = scmp.eq.s32.totalorder %s21, 0
      %p95 = por %p93, %p94
      %p96 = scmp.le.s32.totalorder 1, %s15
      %p97 = scmp.lt.s32.totalorder %s15, 3
      %p98 = pnand %p96, %p97
      %p99 = pneg %p98
      // Predicated region
      $region9: #{tpu_custom_call.1} parent=5 // pred_check
        _
      $region10: #{tpu_custom_call.1} parent=5 // pred_check_branch
        %101 = sbr.rel (%p98) target = $region12
      $region11: #{tpu_custom_call.1} parent=5 // pred_region
        %s102 = ssub.s32 %s15, 1
        // Predicated region
        $region13: #{tpu_custom_call.1} parent=11 // pred_check
          %p103 = pneg %p62
        $region14: #{tpu_custom_call.1} parent=11 // pred_check_branch
          %105 = sbr.rel (%p103) target = $region16
        $region15: #{tpu_custom_call.1} parent=11 // pred_region
          %s107 = ssub.s32 128, 128
          %108 = vsyncadd [#allocation6], %s107
          %s110 = sshll.u32 [#allocation5], 4
          %s111 = int_to_ptr.vmem [resolvable:$true] %s110
          %113 = dma.hbm_to_vmem [thread:$0]  %s1, 128, %s111, [#allocation6]
        $region16: #{tpu_custom_call.1} parent=11 // pred_fallthru
          _
      $region12: #{tpu_custom_call.1} parent=5 // pred_fallthru
        _
      %p114 = scmp.lt.s32.totalorder %s15, 2
      // Predicated region
      $region17: #{tpu_custom_call.1} parent=5 // pred_check
        %p115 = pneg %p114
      $region18: #{tpu_custom_call.1} parent=5 // pred_check_branch
        %117 = sbr.rel (%p115) target = $region20
      $region19: #{tpu_custom_call.1} parent=5 // pred_region
        // Predicated region
        $region21: #{tpu_custom_call.1} parent=19 // pred_check
          %p118 = pneg %p35
        $region22: #{tpu_custom_call.1} parent=19 // pred_check_branch
          %120 = sbr.rel (%p118) target = $region24
        $region23: #{tpu_custom_call.1} parent=19 // pred_region
          %s121 = sand.u32 %s25, 1
          %s122 = scalar_lea.sflag [#allocation3], %s121
          %s123 = sand.u32 %s25, 1
          %s124 = smul.addr %s123, 8
          %s125 = scalar_lea.vmem [#allocation2], %s124
          %s127 = ssub.s32 128, 128
          %128 = vsyncadd %s122, %s127
          %s129 = smul.addr %s15, 128
          %s130 = scalar_lea.hbm %s0, %s129
          %s132 = sshll.u32 %s125, 4
          %s133 = int_to_ptr.vmem [resolvable:$true] %s132
          %135 = dma.hbm_to_vmem [thread:$0]  %s130, 128, %s133, %s122
        $region24: #{tpu_custom_call.1} parent=19 // pred_fallthru
          _
      $region20: #{tpu_custom_call.1} parent=5 // pred_fallthru
        _
      %p136 = scmp.le.s32.totalorder 1, %s15
      %p137 = scmp.lt.s32.totalorder %s15, 3
      %p138 = pnand %p136, %p137
      %p139 = pneg %p138
      // Predicated region
      $region25: #{tpu_custom_call.1} parent=5 // pred_check
        _
      $region26: #{tpu_custom_call.1} parent=5 // pred_check_branch
        %141 = sbr.rel (%p138) target = $region28
      $region27: #{tpu_custom_call.1} parent=5 // pred_region
        %s142 = ssub.s32 %s15, 1
        %s143 = sand.u32 %s28, 1
        %s144 = scalar_lea.sflag [#allocation3], %s143
        %s145 = sand.u32 %s28, 1
        %s146 = smul.addr %s145, 8
        %s147 = scalar_lea.vmem [#allocation2], %s146
        // Predicated region
        $region29: #{tpu_custom_call.1} parent=27 // pred_check
          %p148 = pneg %p41
        $region30: #{tpu_custom_call.1} parent=27 // pred_check_branch
          %150 = sbr.rel (%p148) target = $region32
        $region31: #{tpu_custom_call.1} parent=27 // pred_region
          %151 = dma.done %s144, 128
        $region32: #{tpu_custom_call.1} parent=27 // pred_fallthru
          _
        // Predicated region
        $region33: #{tpu_custom_call.1} parent=27 // pred_check
          %p152 = pneg %p62
        $region34: #{tpu_custom_call.1} parent=27 // pred_check_branch
          %154 = sbr.rel (%p152) target = $region36
        $region35: #{tpu_custom_call.1} parent=27 // pred_region
          %155 = dma.done [#allocation6], 128
        $region36: #{tpu_custom_call.1} parent=27 // pred_fallthru
          _
        %s156 = sand.u32 %s28, 1
        %s157 = scalar_lea.sflag [#allocation3], %s156
        %s158 = sand.u32 %s28, 1
        %s159 = smul.addr %s158, 8
        %s160 = scalar_lea.vmem [#allocation2], %s159
        %p161 = pneg %p41
        %p162 = pneg %p38
        %p163 = pneg %p62
        %p164 = pneg %p59
        %p165 = pneg %p88
        %p166 = pneg %p85
        %s167 = sand.u32 %s75, 1
        %s168 = scalar_lea.sflag [#allocation4], %s167
        %s169 = sand.u32 %s75, 1
        %s170 = smul.addr %s169, 8
        %s171 = scalar_lea.vmem [#allocation7], %s170
        %v172 = vld [vmem:[%s147] sm:$0xff]
        %v173 = vld [vmem:[#allocation5] sm:$0xff]
        %v174 = vadd.f32 %v172, %v173
        %175 = vst [vmem:[%s171] sm:$0xff] %v174
        %s176 = sand.u32 %s75, 1
        %s177 = scalar_lea.sflag [#allocation4], %s176
        %s178 = sand.u32 %s75, 1
        %s179 = smul.addr %s178, 8
        %s180 = scalar_lea.vmem [#allocation7], %s179
        // Predicated region
        $region37: #{tpu_custom_call.1} parent=27 // pred_check
          %p181 = pneg %p85
        $region38: #{tpu_custom_call.1} parent=27 // pred_check_branch
          %183 = sbr.rel (%p181) target = $region40
        $region39: #{tpu_custom_call.1} parent=27 // pred_region
          %s185 = ssub.s32 128, 128
          %186 = vsyncadd %s177, %s185
          %s187 = smul.addr %s20, 128
          %s188 = scalar_lea.hbm %s2, %s187
          %s190 = sshll.u32 %s180, 4
          %s191 = int_to_ptr.vmem [resolvable:$true] %s190
          %193 = dma.vmem_to_hbm [thread:$0]  %s191, 128, %s188, %s177
        $region40: #{tpu_custom_call.1} parent=27 // pred_fallthru
          _
      $region28: #{tpu_custom_call.1} parent=5 // pred_fallthru
        _
      %p194 = scmp.le.s32.totalorder 2, %s15
      // Predicated region
      $region41: #{tpu_custom_call.1} parent=5 // pred_check
        %p195 = pneg %p194
      $region42: #{tpu_custom_call.1} parent=5 // pred_check_branch
        %197 = sbr.rel (%p195) target = $region44
      $region43: #{tpu_custom_call.1} parent=5 // pred_region
        %s198 = ssub.s32 %s15, 2
        // Predicated region
        $region45: #{tpu_custom_call.1} parent=43 // pred_check
          %p199 = pneg %p91
        $region46: #{tpu_custom_call.1} parent=43 // pred_check_branch
          %201 = sbr.rel (%p199) target = $region48
        $region47: #{tpu_custom_call.1} parent=43 // pred_region
          %s202 = sand.u32 %s76, 1
          %s203 = scalar_lea.sflag [#allocation4], %s202
          %s204 = sand.u32 %s76, 1
          %s205 = smul.addr %s204, 8
          %s206 = scalar_lea.vmem [#allocation7], %s205
          %207 = dma.done %s203, 128
        $region48: #{tpu_custom_call.1} parent=43 // pred_fallthru
          _
      $region44: #{tpu_custom_call.1} parent=5 // pred_fallthru
        _
    $region6: #{tpu_custom_call.1} parent=1 // loop_footer
      %s19 = sadd.s32 1, %s15
    $region7: #{tpu_custom_call.1} parent=1 // loop_footer_branch
      %14 = sbr.rel target = $region3
    $region8: #{tpu_custom_call.1} parent=1 // loop_exit
      _
    %208 = vsyncpa [#allocation3], 1
    %s209 = scalar_lea.sflag [#allocation3], 1
    %210 = vsyncpa %s209, 1
    %211 = vsyncpa [#allocation6], 1
    %212 = vsyncpa [#allocation4], 1
    %s213 = scalar_lea.sflag [#allocation4], 1
    %214 = vsyncpa %s213, 1

// kernel: tpu_custom_call.1
$region0: #{tpu_custom_call.1}
  #allocation0 [shape = 'u32[]', space=smem, size = 0x4, offset = 0x4, fixed_abs, tag = 'smem constant byte address 0x4 - core index']
  #allocation1 [shape = 'u32[144,128]{1,0:T(1,128)}', space=vmem, size = 0x12000, scoped, tag = 'internal scratch']
  %s0 = inlined_call_operand.hbm [shape: f32[2,8,32], index: 0, kind: input, shape index: {}]
  %s1 = inlined_call_operand.hbm [shape: bf16[32,96], index: 1, kind: input, shape index: {}]
  %s2 = inlined_call_operand.vmem [shape: f32[1,96], index: 2, kind: input, shape index: {}]
  %s3 = inlined_call_operand.hbm [shape: bf16[32,32], index: 3, kind: input, shape index: {}]
  %s4 = inlined_call_operand.vmem [shape: f32[1,32], index: 4, kind: input, shape index: {}]
  %s5 = inlined_call_operand.vmem [shape: f32[1,32], index: 5, kind: input, shape index: {}]
  %s6 = inlined_call_operand.vmem [shape: f32[1,32], index: 6, kind: input, shape index: {}]
  %s7 = inlined_call_operand.hbm [shape: f32[2,8,32], index: 7, kind: output, shape index: {}]
  %s8 = sld [smem:[#allocation0]]
  $region73: #{tpu_custom_call.1} parent=0
    _
  %s10 = ssub.s32 1, %s8
  %s11 = scalar_select 0, %s10, %s8
  $region1: #{tpu_custom_call.1} parent=0
    #allocation2 [shape = 'u8[8192]{0}', space=vmem, size = 0x2000, scoped, tag = 'input window, operand 0']
    #allocation3 [shape = 's32[2]{0}', space=sflag, size = 0x8, scoped, tag = 'scoped memory for tpu_custom_call.1']
    #allocation4 [shape = 's32[2]{0}', space=sflag, size = 0x8, scoped, tag = 'scoped memory for tpu_custom_call.1']
    #allocation5 [shape = 'u8[8192]{0}', space=vmem, size = 0x2000, scoped, tag = 'input window, operand 1, single buffered']
    #allocation6 [shape = 's32[1]{0}', space=sflag, size = 0x4, scoped, tag = 'scoped memory for tpu_custom_call.1']
    #allocation7 [shape = 'u8[8192]{0}', space=vmem, size = 0x2000, scoped, tag = 'input window, operand 3, single buffered']
    #allocation8 [shape = 'u8[8192]{0}', space=vmem, size = 0x2000, scoped, tag = 'output window, operand 0']
    %12 = vsyncpa [#allocation3], 0
    %s13 = scalar_lea.sflag [#allocation3], 1
    %14 = vsyncpa %s13, 0
    %15 = vsyncpa [#allocation6], 0
    %16 = vsyncpa [#allocation4], 0
    %s17 = scalar_lea.sflag [#allocation4], 1
    %18 = vsyncpa %s17, 0
    loop: start=0, step=1, limit=4
    $region2: #{tpu_custom_call.1} parent=1 // loop_pre_header
      _
    $region3: #{tpu_custom_call.1} parent=1 // loop_header
      %s20 = sphi 0, %s24
      %p21 = scmp.ge.s32.totalorder %s20, 4
      %s30 = sphi 0, %s32
      %s33 = sphi 0, %s30
      %s34 = sphi 0, %s33
      %s50 = sphi 0, %s34
      %s54 = sphi 0, %s54
      %s56 = sphi 0, %s54
      %s57 = sphi 0, %s56
      %s71 = sphi 0, %s57
      %s75 = sphi 0, %s75
      %s77 = sphi 0, %s75
      %s78 = sphi 0, %s77
      %s92 = sphi 0, %s78
      %s96 = sphi 0, %s96
      %s98 = sphi 0, %s96
      %s99 = sphi 0, %s98
      %s113 = sphi 0, %s99
      %s117 = sphi 0, %s117
      %s119 = sphi 0, %s117
      %s120 = sphi 0, %s119
      %s134 = sphi 0, %s120
      %s138 = sphi 0, %s138
      %s140 = sphi 0, %s138
      %s141 = sphi 0, %s140
      %s155 = sphi 0, %s141
      %s159 = sphi 0, %s159
      %s161 = sphi 0, %s159
      %s162 = sphi 0, %s161
      %s176 = sphi 0, %s162
      %s182 = sphi 0, %s184
      %s185 = sphi 0, %s182
      %s186 = sphi 0, %s185
      %s202 = sphi 0, %s186
    $region4: #{tpu_custom_call.1} parent=1 // loop_header_branch
      %23 = sbr.rel (%p21) target = $region8
    $region5: #{tpu_custom_call.1} parent=1 // loop_body
      %s25 = ssub.s32 %s20, 1
      %s26 = ssub.s32 %s20, 2
      %s27 = sadd.s32 %s20, 1
      %s28 = ssub.s32 %s20, %s27
      %p29 = scmp.eq.s32.totalorder %s28, 0
      %s31 = sadd.s32 %s30, 1
      %s32 = scalar_select %p29, %s30, %s31
      %p35 = pneg %p29
      %p36 = scmp.eq.s32.totalorder %s20, 1
      %p37 = por %p35, %p36
      %p38 = scmp.ne.s32.totalorder %s30, %s33
      %p39 = scmp.eq.s32.totalorder %s20, 0
      %p40 = por %p38, %p39
      %p41 = scmp.ne.s32.totalorder %s30, %s33
      %p42 = scmp.eq.s32.totalorder %s25, 1
      %p43 = por %p41, %p42
      %p44 = scmp.ne.s32.totalorder %s33, %s34
      %p45 = scmp.eq.s32.totalorder %s25, 0
      %p46 = por %p44, %p45
      %p47 = scmp.ne.s32.totalorder %s33, %s34
      %p48 = scmp.eq.s32.totalorder %s26, 1
      %p49 = por %p47, %p48
      %p51 = scmp.ne.s32.totalorder %s34, %s50
      %p52 = scmp.eq.s32.totalorder %s26, 0
      %p53 = por %p51, %p52
      %s55 = sadd.s32 %s54, 1
      %p58 = scmp.eq.s32.totalorder %s20, 1
      %p59 = scmp.ne.s32.totalorder %s54, %s56
      %p60 = scmp.eq.s32.totalorder %s20, 0
      %p61 = por %p59, %p60
      %p62 = scmp.ne.s32.totalorder %s54, %s56
      %p63 = scmp.eq.s32.totalorder %s25, 1
      %p64 = por %p62, %p63
      %p65 = scmp.ne.s32.totalorder %s56, %s57
      %p66 = scmp.eq.s32.totalorder %s25, 0
      %p67 = por %p65, %p66
      %p68 = scmp.ne.s32.totalorder %s56, %s57
      %p69 = scmp.eq.s32.totalorder %s26, 1
      %p70 = por %p68, %p69
      %p72 = scmp.ne.s32.totalorder %s57, %s71
      %p73 = scmp.eq.s32.totalorder %s26, 0
      %p74 = por %p72, %p73
      %s76 = sadd.s32 %s75, 1
      %p79 = scmp.eq.s32.totalorder %s20, 1
      %p80 = scmp.ne.s32.totalorder %s75, %s77
      %p81 = scmp.eq.s32.totalorder %s20, 0
      %p82 = por %p80, %p81
      %p83 = scmp.ne.s32.totalorder %s75, %s77
      %p84 = scmp.eq.s32.totalorder %s25, 1
      %p85 = por %p83, %p84
      %p86 = scmp.ne.s32.totalorder %s77, %s78
      %p87 = scmp.eq.s32.totalorder %s25, 0
      %p88 = por %p86, %p87
      %p89 = scmp.ne.s32.totalorder %s77, %s78
      %p90 = scmp.eq.s32.totalorder %s26, 1
      %p91 = por %p89, %p90
      %p93 = scmp.ne.s32.totalorder %s78, %s92
      %p94 = scmp.eq.s32.totalorder %s26, 0
      %p95 = por %p93, %p94
      %s97 = sadd.s32 %s96, 1
      %p100 = scmp.eq.s32.totalorder %s20, 1
      %p101 = scmp.ne.s32.totalorder %s96, %s98
      %p102 = scmp.eq.s32.totalorder %s20, 0
      %p103 = por %p101, %p102
      %p104 = scmp.ne.s32.totalorder %s96, %s98
      %p105 = scmp.eq.s32.totalorder %s25, 1
      %p106 = por %p104, %p105
      %p107 = scmp.ne.s32.totalorder %s98, %s99
      %p108 = scmp.eq.s32.totalorder %s25, 0
      %p109 = por %p107, %p108
      %p110 = scmp.ne.s32.totalorder %s98, %s99
      %p111 = scmp.eq.s32.totalorder %s26, 1
      %p112 = por %p110, %p111
      %p114 = scmp.ne.s32.totalorder %s99, %s113
      %p115 = scmp.eq.s32.totalorder %s26, 0
      %p116 = por %p114, %p115
      %s118 = sadd.s32 %s117, 1
      %p121 = scmp.eq.s32.totalorder %s20, 1
      %p122 = scmp.ne.s32.totalorder %s117, %s119
      %p123 = scmp.eq.s32.totalorder %s20, 0
      %p124 = por %p122, %p123
      %p125 = scmp.ne.s32.totalorder %s117, %s119
      %p126 = scmp.eq.s32.totalorder %s25, 1
      %p127 = por %p125, %p126
      %p128 = scmp.ne.s32.totalorder %s119, %s120
      %p129 = scmp.eq.s32.totalorder %s25, 0
      %p130 = por %p128, %p129
      %p131 = scmp.ne.s32.totalorder %s119, %s120
      %p132 = scmp.eq.s32.totalorder %s26, 1
      %p133 = por %p131, %p132
      %p135 = scmp.ne.s32.totalorder %s120, %s134
      %p136 = scmp.eq.s32.totalorder %s26, 0
      %p137 = por %p135, %p136
      %s139 = sadd.s32 %s138, 1
      %p142 = scmp.eq.s32.totalorder %s20, 1
      %p143 = scmp.ne.s32.totalorder %s138, %s140
      %p144 = scmp.eq.s32.totalorder %s20, 0
      %p145 = por %p143, %p144
      %p146 = scmp.ne.s32.totalorder %s138, %s140
      %p147 = scmp.eq.s32.totalorder %s25, 1
      %p148 = por %p146, %p147
      %p149 = scmp.ne.s32.totalorder %s140, %s141
      %p150 = scmp.eq.s32.totalorder %s25, 0
      %p151 = por %p149, %p150
      %p152 = scmp.ne.s32.totalorder %s140, %s141
      %p153 = scmp.eq.s32.totalorder %s26, 1
      %p154 = por %p152, %p153
      %p156 = scmp.ne.s32.totalorder %s141, %s155
      %p157 = scmp.eq.s32.totalorder %s26, 0
      %p158 = por %p156, %p157
      %s160 = sadd.s32 %s159, 1
      %p163 = scmp.eq.s32.totalorder %s20, 1
      %p164 = scmp.ne.s32.totalorder %s159, %s161
      %p165 = scmp.eq.s32.totalorder %s20, 0
      %p166 = por %p164, %p165
      %p167 = scmp.ne.s32.totalorder %s159, %s161
      %p168 = scmp.eq.s32.totalorder %s25, 1
      %p169 = por %p167, %p168
      %p170 = scmp.ne.s32.totalorder %s161, %s162
      %p171 = scmp.eq.s32.totalorder %s25, 0
      %p172 = por %p170, %p171
      %p173 = scmp.ne.s32.totalorder %s161, %s162
      %p174 = scmp.eq.s32.totalorder %s26, 1
      %p175 = por %p173, %p174
      %p177 = scmp.ne.s32.totalorder %s162, %s176
      %p178 = scmp.eq.s32.totalorder %s26, 0
      %p179 = por %p177, %p178
      %s180 = ssub.s32 %s20, %s27
      %p181 = scmp.eq.s32.totalorder %s180, 0
      %s183 = sadd.s32 %s182, 1
      %s184 = scalar_select %p181, %s182, %s183
      %p187 = pneg %p181
      %p188 = scmp.eq.s32.totalorder %s20, 1
      %p189 = por %p187, %p188
      %p190 = scmp.ne.s32.totalorder %s182, %s185
      %p191 = scmp.eq.s32.totalorder %s20, 0
      %p192 = por %p190, %p191
      %p193 = scmp.ne.s32.totalorder %s182, %s185
      %p194 = scmp.eq.s32.totalorder %s25, 1
      %p195 = por %p193, %p194
      %p196 = scmp.ne.s32.totalorder %s185, %s186
      %p197 = scmp.eq.s32.totalorder %s25, 0
      %p198 = por %p196, %p197
      %p199 = scmp.ne.s32.totalorder %s185, %s186
      %p200 = scmp.eq.s32.totalorder %s26, 1
      %p201 = por %p199, %p200
      %p203 = scmp.ne.s32.totalorder %s186, %s202
      %p204 = scmp.eq.s32.totalorder %s26, 0
      %p205 = por %p203, %p204
      %p206 = scmp.le.s32.totalorder 1, %s20
      %p207 = scmp.lt.s32.totalorder %s20, 3
      %p208 = pnand %p206, %p207
      %p209 = pneg %p208
      // Predicated region
      $region9: #{tpu_custom_call.1} parent=5 // pred_check
        _
      $region10: #{tpu_custom_call.1} parent=5 // pred_check_branch
        %211 = sbr.rel (%p208) target = $region12
      $region11: #{tpu_custom_call.1} parent=5 // pred_region
        %s212 = ssub.s32 %s20, 1
        // Predicated region
        $region13: #{tpu_custom_call.1} parent=11 // pred_check
          %p213 = pneg %p67
        $region14: #{tpu_custom_call.1} parent=11 // pred_check_branch
          %215 = sbr.rel (%p213) target = $region16
        $region15: #{tpu_custom_call.1} parent=11 // pred_region
          %s217 = ssub.s32 256, 256
          %218 = vsyncadd [#allocation6], %s217
          %s219 = sshll.u32 [#allocation5], 4
          %s220 = int_to_ptr.vmem [resolvable:$true] %s219
          %225 = dma.hbm_to_vmem [thread:$0]  %s1, 256, %s220, [#allocation6], 64, 64, 4
        $region16: #{tpu_custom_call.1} parent=11 // pred_fallthru
          _
        // Predicated region
        $region17: #{tpu_custom_call.1} parent=11 // pred_check
          %p226 = pneg %p88
        $region18: #{tpu_custom_call.1} parent=11 // pred_check_branch
          %228 = sbr.rel (%p226) target = $region20
        $region19: #{tpu_custom_call.1} parent=11 // pred_region
          _
        $region20: #{tpu_custom_call.1} parent=11 // pred_fallthru
          _
        // Predicated region
        $region21: #{tpu_custom_call.1} parent=11 // pred_check
          %p229 = pneg %p109
        $region22: #{tpu_custom_call.1} parent=11 // pred_check_branch
          %231 = sbr.rel (%p229) target = $region24
        $region23: #{tpu_custom_call.1} parent=11 // pred_region
          %s233 = ssub.s32 256, 256
          %234 = vsyncadd [#allocation6], %s233
          %s235 = sshll.u32 [#allocation7], 4
          %s236 = int_to_ptr.vmem [resolvable:$true] %s235
          %241 = dma.hbm_to_vmem [thread:$0]  %s3, 256, %s236, [#allocation6], 64, 64, 4
        $region24: #{tpu_custom_call.1} parent=11 // pred_fallthru
          _
        // Predicated region
        $region25: #{tpu_custom_call.1} parent=11 // pred_check
          %p242 = pneg %p130
        $region26: #{tpu_custom_call.1} parent=11 // pred_check_branch
          %244 = sbr.rel (%p242) target = $region28
        $region27: #{tpu_custom_call.1} parent=11 // pred_region
          _
        $region28: #{tpu_custom_call.1} parent=11 // pred_fallthru
          _
        // Predicated region
        $region29: #{tpu_custom_call.1} parent=11 // pred_check
          %p245 = pneg %p151
        $region30: #{tpu_custom_call.1} parent=11 // pred_check_branch
          %247 = sbr.rel (%p245) target = $region32
        $region31: #{tpu_custom_call.1} parent=11 // pred_region
          _
        $region32: #{tpu_custom_call.1} parent=11 // pred_fallthru
          _
        // Predicated region
        $region33: #{tpu_custom_call.1} parent=11 // pred_check
          %p248 = pneg %p172
        $region34: #{tpu_custom_call.1} parent=11 // pred_check_branch
          %250 = sbr.rel (%p248) target = $region36
        $region35: #{tpu_custom_call.1} parent=11 // pred_region
          _
        $region36: #{tpu_custom_call.1} parent=11 // pred_fallthru
          _
      $region12: #{tpu_custom_call.1} parent=5 // pred_fallthru
        _
      %p251 = scmp.lt.s32.totalorder %s20, 2
      // Predicated region
      $region37: #{tpu_custom_call.1} parent=5 // pred_check
        %p252 = pneg %p251
      $region38: #{tpu_custom_call.1} parent=5 // pred_check_branch
        %254 = sbr.rel (%p252) target = $region40
      $region39: #{tpu_custom_call.1} parent=5 // pred_region
        // Predicated region
        $region41: #{tpu_custom_call.1} parent=39 // pred_check
          %p255 = pneg %p40
        $region42: #{tpu_custom_call.1} parent=39 // pred_check_branch
          %257 = sbr.rel (%p255) target = $region44
        $region43: #{tpu_custom_call.1} parent=39 // pred_region
          %s258 = sand.u32 %s30, 1
          %s259 = scalar_lea.sflag [#allocation3], %s258
          %s260 = sand.u32 %s30, 1
          %s261 = smul.addr %s260, 8
          %s262 = scalar_lea.vmem [#allocation2], %s261
          %s264 = ssub.s32 128, 128
          %265 = vsyncadd %s259, %s264
          %s266 = smul.addr %s20, 128
          %s267 = scalar_lea.hbm %s0, %s266
          %s269 = sshll.u32 %s262, 4
          %s270 = int_to_ptr.vmem [resolvable:$true] %s269
          %272 = dma.hbm_to_vmem [thread:$0]  %s267, 128, %s270, %s259
        $region44: #{tpu_custom_call.1} parent=39 // pred_fallthru
          _
      $region40: #{tpu_custom_call.1} parent=5 // pred_fallthru
        _
      %p273 = scmp.le.s32.totalorder 1, %s20
      %p274 = scmp.lt.s32.totalorder %s20, 3
      %p275 = pnand %p273, %p274
      %p276 = pneg %p275
      // Predicated region
      $region45: #{tpu_custom_call.1} parent=5 // pred_check
        _
      $region46: #{tpu_custom_call.1} parent=5 // pred_check_branch
        %278 = sbr.rel (%p275) target = $region48
      $region47: #{tpu_custom_call.1} parent=5 // pred_region
        %s279 = ssub.s32 %s20, 1
        %s280 = sand.u32 %s33, 1
        %s281 = scalar_lea.sflag [#allocation3], %s280
        %s282 = sand.u32 %s33, 1
        %s283 = smul.addr %s282, 8
        %s284 = scalar_lea.vmem [#allocation2], %s283
        // Predicated region
        $region49: #{tpu_custom_call.1} parent=47 // pred_check
          %p285 = pneg %p46
        $region50: #{tpu_custom_call.1} parent=47 // pred_check_branch
          %287 = sbr.rel (%p285) target = $region52
        $region51: #{tpu_custom_call.1} parent=47 // pred_region
          %288 = dma.done %s281, 128
        $region52: #{tpu_custom_call.1} parent=47 // pred_fallthru
          _
        // Predicated region
        $region53: #{tpu_custom_call.1} parent=47 // pred_check
          %p289 = pneg %p67
        $region54: #{tpu_custom_call.1} parent=47 // pred_check_branch
          %291 = sbr.rel (%p289) target = $region56
        $region55: #{tpu_custom_call.1} parent=47 // pred_region
          %292 = dma.done [#allocation6], 256
        $region56: #{tpu_custom_call.1} parent=47 // pred_fallthru
          _
        // Predicated region
        $region57: #{tpu_custom_call.1} parent=47 // pred_check
          %p293 = pneg %p109
        $region58: #{tpu_custom_call.1} parent=47 // pred_check_branch
          %295 = sbr.rel (%p293) target = $region60
        $region59: #{tpu_custom_call.1} parent=47 // pred_region
          %296 = dma.done [#allocation6], 256
        $region60: #{tpu_custom_call.1} parent=47 // pred_fallthru
          _
        %s297 = sand.u32 %s33, 1
        %s298 = scalar_lea.sflag [#allocation3], %s297
        %s299 = sand.u32 %s33, 1
        %s300 = smul.addr %s299, 8
        %s301 = scalar_lea.vmem [#allocation2], %s300
        %p302 = pneg %p46
        %p303 = pneg %p43
        %p304 = pneg %p67
        %p305 = pneg %p64
        %p306 = pneg %p88
        %p307 = pneg %p85
        %p308 = pneg %p109
        %p309 = pneg %p106
        %p310 = pneg %p130
        %p311 = pneg %p127
        %p312 = pneg %p151
        %p313 = pneg %p148
        %p314 = pneg %p172
        %p315 = pneg %p169
        %p316 = pneg %p198
        %p317 = pneg %p195
        %s318 = sand.u32 %s185, 1
        %s319 = scalar_lea.sflag [#allocation4], %s318
        %s320 = sand.u32 %s185, 1
        %s321 = smul.addr %s320, 8
        %s322 = scalar_lea.vmem [#allocation8], %s321
        %v324 = vld [vmem:[%s284] sm:$0xff]
        %v325 = vpack.c.bf16 %v324, %v324
        %v326 = vld [vmem:[#allocation5] sm:$0xf]
        %v327 = vld [vmem:[#allocation5 + $0x4] sm:$0xf]
        %v328 = vld [vmem:[#allocation5 + $0x8] sm:$0xf]
        %v329 = vld [vmem:[#allocation5 + $0xc] sm:$0xf]
        %v330 = vld [vmem:[%s2] sm:$0x1]
        %v332 = vlaneseq
        %v333 = vshrl.u32 %v332, 7
        %v334 = vsub.s32 0, %v333
        %v335 = vrot.slane %v330, %v334
        %v341 = vunpack.c.l.b16 %v326
        %v342 = vunpack.c.l.b16 %v327
        %v343 = vunpack.c.l.b16 %v328
        %v344 = vunpack.c.l.b16 %v329
        %v345 = vpack.c.b16 %v342, %v341
        %v346 = vpack.c.b16 %v344, %v343
        %vm349 = vcmask 261120
        %v351 = vsel %vm349, %v325, 0
        %353 = vmatprep.subr.bf16.mxu0 0
        %354 = vmatpush1.bf16.msra.mxu0 0
        %355 = vmatprep.subr.bf16.mxu0 0
        %356 = vmatpush1.bf16.msra.mxu0 0
        %357 = vmatprep.subr.bf16.mxu0 0
        %358 = vmatpush1.bf16.msra.mxu0 0
        %359 = vmatprep.subr.bf16.mxu0 0
        %360 = vmatpush1.bf16.msra.mxu0 0
        %361 = vmatprep.subr.bf16.mxu0 0
        %362 = vmatpush1.bf16.msra.mxu0 0
        %363 = vmatprep.subr.bf16.mxu0 0
        %364 = vmatpush1.bf16.msra.mxu0 0
        %365 = vmatprep.subr.bf16.mxu0 0
        %366 = vmatpush1.bf16.msra.mxu0 %v346
        %367 = vmatprep.subr.bf16.mxu0 0
        %368 = vmatpush1.bf16.msra.mxu0 %v345
        %369 = vmatprep.subr.bf16.mxu0 0
        %370 = vmatpush2.bf16.msra.mxu0 0
        %371 = vmatprep.subr.bf16.mxu0 0
        %372 = vmatpush2.bf16.msra.mxu0 0
        %373 = vmatprep.subr.bf16.mxu0 0
        %374 = vmatpush2.bf16.msra.mxu0 0
        %375 = vmatprep.subr.bf16.mxu0 0
        %376 = vmatpush2.bf16.msra.mxu0 0
        %377 = vmatprep.subr.bf16.mxu0 0
        %378 = vmatpush2.bf16.msra.mxu0 0
        %379 = vmatprep.subr.bf16.mxu0 0
        %380 = vmatpush2.bf16.msra.mxu0 0
        %381 = vmatprep.subr.bf16.mxu0 0
        %382 = vmatpush2.bf16.msra.mxu0 0
        %383 = vmatprep.subr.bf16.mxu0 0
        %384 = vmatpush2.bf16.msra.mxu0 0
        %385 = vmatprep.mubr.bf16.mxu0 0
        %386 = vmatmul.mubr.bf16.gmra.mxu0 %v351
        %v387 = vpop.f32.mrf.mxu0
        %v388 = vadd.f32 %v335, %v387
        %v389 = vpop.f32.mrf.mxu0
        %v390 = vpop.f32.mrf.mxu0
        %v391 = vpop.f32.mrf.mxu0
        %392 = vdwg.mxu0
        %394 = vrot.lane.b32.xlu0 %v388, 120
        %v395 = vpop.permute.xlu0 %394
        %397 = vrot.lane.b32.xlu0 %v388, 112
        %v398 = vpop.permute.xlu0 %397
        %400 = vrot.lane.b32.xlu0 %v388, 104
        %v401 = vpop.permute.xlu0 %400
        %v403 = vcombine.low %v388, %v398
        %v404 = vcombine.high %v388, %v398
        %v406 = vunpack.c.l.s4 1983009808
        %v407 = vunpack.c.0.s8 %v406
        %v408 = vlaneseq
        %v409 = vshrl.u32 %v408, 7
        %v410 = vsub.s32 %v407, %v409
        %v411 = vrot.slane %v403, %v410
        %v413 = vunpack.c.l.s4 1983009808
        %v414 = vunpack.c.0.s8 %v413
        %v415 = vlaneseq
        %v416 = vshrl.u32 %v415, 7
        %v417 = vsub.s32 %v414, %v416
        %v418 = vrot.slane %v404, %v417
        %v419 = vcombine.low %v395, %v401
        %v420 = vcombine.high %v395, %v401
        %v422 = vunpack.c.l.s4 1983009808
        %v423 = vunpack.c.0.s8 %v422
        %v424 = vlaneseq
        %v425 = vshrl.u32 %v424, 7
        %v426 = vsub.s32 %v423, %v425
        %v427 = vrot.slane %v419, %v426
        %v429 = vunpack.c.l.s4 1983009808
        %v430 = vunpack.c.0.s8 %v429
        %v431 = vlaneseq
        %v432 = vshrl.u32 %v431, 7
        %v433 = vsub.s32 %v430, %v432
        %v434 = vrot.slane %v420, %v433
        %v435 = vcombine.low %v411, %v427
        %v436 = vcombine.high %v411, %v427
        %v438 = vunpack.c.l.s4 1934713408
        %v439 = vunpack.c.0.s8 %v438
        %v440 = vlaneseq
        %v441 = vshrl.u32 %v440, 7
        %v442 = vsub.s32 %v439, %v441
        %v443 = vrot.slane %v435, %v442
        %v445 = vunpack.c.l.s4 1934713408
        %v446 = vunpack.c.0.s8 %v445
        %v447 = vlaneseq
        %v448 = vshrl.u32 %v447, 7
        %v449 = vsub.s32 %v446, %v448
        %v450 = vrot.slane %v436, %v449
        %v451 = vcombine.low %v418, %v434
        %v452 = vcombine.high %v418, %v434
        %v454 = vunpack.c.l.s4 1934713408
        %v455 = vunpack.c.0.s8 %v454
        %v456 = vlaneseq
        %v457 = vshrl.u32 %v456, 7
        %v458 = vsub.s32 %v455, %v457
        %v459 = vrot.slane %v451, %v458
        %v461 = vunpack.c.l.s4 1934713408
        %v462 = vunpack.c.0.s8 %v461
        %v463 = vlaneseq
        %v464 = vshrl.u32 %v463, 7
        %v465 = vsub.s32 %v462, %v464
        %v466 = vrot.slane %v452, %v465
        %v467 = vcombine.high %v443, 0.0
        %v468 = vcombine.high %v450, 0.0
        %v469 = vcombine.high %v459, 0.0
        %v470 = vcombine.high %v466, 0.0
        %471 = vrot.lane.b32.xlu0 %v388, 96
        %v472 = vpop.permute.xlu0 %471
        %473 = vrot.lane.b32.xlu0 %v395, 96
        %v474 = vpop.permute.xlu0 %473
        %475 = vrot.lane.b32.xlu0 %v398, 96
        %v476 = vpop.permute.xlu0 %475
        %477 = vrot.lane.b32.xlu0 %v401, 96
        %v478 = vpop.permute.xlu0 %477
        %v483 = vcombine.low %v472, %v476
        %v484 = vcombine.high %v472, %v476
        %v486 = vunpack.c.l.s4 1983009808
        %v487 = vunpack.c.0.s8 %v486
        %v488 = vlaneseq
        %v489 = vshrl.u32 %v488, 7
        %v490 = vsub.s32 %v487, %v489
        %v491 = vrot.slane %v483, %v490
        %v493 = vunpack.c.l.s4 1983009808
        %v494 = vunpack.c.0.s8 %v493
        %v495 = vlaneseq
        %v496 = vshrl.u32 %v495, 7
        %v497 = vsub.s32 %v494, %v496
        %v498 = vrot.slane %v484, %v497
        %v499 = vcombine.low %v474, %v478
        %v500 = vcombine.high %v474, %v478
        %v502 = vunpack.c.l.s4 1983009808
        %v503 = vunpack.c.0.s8 %v502
        %v504 = vlaneseq
        %v505 = vshrl.u32 %v504, 7
        %v506 = vsub.s32 %v503, %v505
        %v507 = vrot.slane %v499, %v506
        %v509 = vunpack.c.l.s4 1983009808
        %v510 = vunpack.c.0.s8 %v509
        %v511 = vlaneseq
        %v512 = vshrl.u32 %v511, 7
        %v513 = vsub.s32 %v510, %v512
        %v514 = vrot.slane %v500, %v513
        %v515 = vcombine.low %v491, %v507
        %v516 = vcombine.high %v491, %v507
        %v518 = vunpack.c.l.s4 1934713408
        %v519 = vunpack.c.0.s8 %v518
        %v520 = vlaneseq
        %v521 = vshrl.u32 %v520, 7
        %v522 = vsub.s32 %v519, %v521
        %v523 = vrot.slane %v515, %v522
        %v525 = vunpack.c.l.s4 1934713408
        %v526 = vunpack.c.0.s8 %v525
        %v527 = vlaneseq
        %v528 = vshrl.u32 %v527, 7
        %v529 = vsub.s32 %v526, %v528
        %v530 = vrot.slane %v516, %v529
        %v531 = vcombine.low %v498, %v514
        %v532 = vcombine.high %v498, %v514
        %v534 = vunpack.c.l.s4 1934713408
        %v535 = vunpack.c.0.s8 %v534
        %v536 = vlaneseq
        %v537 = vshrl.u32 %v536, 7
        %v538 = vsub.s32 %v535, %v537
        %v539 = vrot.slane %v531, %v538
        %v541 = vunpack.c.l.s4 1934713408
        %v542 = vunpack.c.0.s8 %v541
        %v543 = vlaneseq
        %v544 = vshrl.u32 %v543, 7
        %v545 = vsub.s32 %v542, %v544
        %v546 = vrot.slane %v532, %v545
        %v547 = vcombine.high %v523, 0.0
        %v548 = vcombine.high %v530, 0.0
        %v549 = vcombine.high %v539, 0.0
        %v550 = vcombine.high %v546, 0.0
        %551 = vrot.lane.b32.xlu0 %v388, 64
        %v552 = vpop.permute.xlu0 %551
        %553 = vrot.lane.b32.xlu0 %v395, 64
        %v554 = vpop.permute.xlu0 %553
        %555 = vrot.lane.b32.xlu0 %v398, 64
        %v556 = vpop.permute.xlu0 %555
        %557 = vrot.lane.b32.xlu0 %v401, 64
        %v558 = vpop.permute.xlu0 %557
        %v563 = vcombine.low %v552, %v556
        %v564 = vcombine.high %v552, %v556
        %v566 = vunpack.c.l.s4 1983009808
        %v567 = vunpack.c.0.s8 %v566
        %v568 = vlaneseq
        %v569 = vshrl.u32 %v568, 7
        %v570 = vsub.s32 %v567, %v569
        %v571 = vrot.slane %v563, %v570
        %v573 = vunpack.c.l.s4 1983009808
        %v574 = vunpack.c.0.s8 %v573
        %v575 = vlaneseq
        %v576 = vshrl.u32 %v575, 7
        %v577 = vsub.s32 %v574, %v576
        %v578 = vrot.slane %v564, %v577
        %v579 = vcombine.low %v554, %v558
        %v580 = vcombine.high %v554, %v558
        %v582 = vunpack.c.l.s4 1983009808
        %v583 = vunpack.c.0.s8 %v582
        %v584 = vlaneseq
        %v585 = vshrl.u32 %v584, 7
        %v586 = vsub.s32 %v583, %v585
        %v587 = vrot.slane %v579, %v586
        %v589 = vunpack.c.l.s4 1983009808
        %v590 = vunpack.c.0.s8 %v589
        %v591 = vlaneseq
        %v592 = vshrl.u32 %v591, 7
        %v593 = vsub.s32 %v590, %v592
        %v594 = vrot.slane %v580, %v593
        %v595 = vcombine.low %v571, %v587
        %v596 = vcombine.high %v571, %v587
        %v598 = vunpack.c.l.s4 1934713408
        %v599 = vunpack.c.0.s8 %v598
        %v600 = vlaneseq
        %v601 = vshrl.u32 %v600, 7
        %v602 = vsub.s32 %v599, %v601
        %v603 = vrot.slane %v595, %v602
        %v605 = vunpack.c.l.s4 1934713408
        %v606 = vunpack.c.0.s8 %v605
        %v607 = vlaneseq
        %v608 = vshrl.u32 %v607, 7
        %v609 = vsub.s32 %v606, %v608
        %v610 = vrot.slane %v596, %v609
        %v611 = vcombine.low %v578, %v594
        %v612 = vcombine.high %v578, %v594
        %v614 = vunpack.c.l.s4 1934713408
        %v615 = vunpack.c.0.s8 %v614
        %v616 = vlaneseq
        %v617 = vshrl.u32 %v616, 7
        %v618 = vsub.s32 %v615, %v617
        %v619 = vrot.slane %v611, %v618
        %v621 = vunpack.c.l.s4 1934713408
        %v622 = vunpack.c.0.s8 %v621
        %v623 = vlaneseq
        %v624 = vshrl.u32 %v623, 7
        %v625 = vsub.s32 %v622, %v624
        %v626 = vrot.slane %v612, %v625
        %v627 = vcombine.high %v603, 0.0
        %v628 = vcombine.high %v610, 0.0
        %v629 = vcombine.high %v619, 0.0
        %v630 = vcombine.high %v626, 0.0
        %v631 = vcombine.low %v443, %v450
        %v633 = vunpack.c.l.s4 1983009808
        %v634 = vunpack.c.0.s8 %v633
        %v635 = vlaneseq
        %v636 = vshrl.u32 %v635, 7
        %v637 = vsub.s32 %v634, %v636
        %v638 = vrot.slane %v631, %v637
        %v639 = vcombine.low %v467, %v468
        %v641 = vunpack.c.l.s4 1983009808
        %v642 = vunpack.c.0.s8 %v641
        %v643 = vlaneseq
        %v644 = vshrl.u32 %v643, 7
        %v645 = vsub.s32 %v642, %v644
        %v646 = vrot.slane %v639, %v645
        %v647 = vcombine.low %v459, %v466
        %v649 = vunpack.c.l.s4 1983009808
        %v650 = vunpack.c.0.s8 %v649
        %v651 = vlaneseq
        %v652 = vshrl.u32 %v651, 7
        %v653 = vsub.s32 %v650, %v652
        %v654 = vrot.slane %v647, %v653
        %v655 = vcombine.low %v469, %v470
        %v657 = vunpack.c.l.s4 1983009808
        %v658 = vunpack.c.0.s8 %v657
        %v659 = vlaneseq
        %v660 = vshrl.u32 %v659, 7
        %v661 = vsub.s32 %v658, %v660
        %v662 = vrot.slane %v655, %v661
        %v663 = vcombine.low %v638, %v646
        %v664 = vcombine.high %v638, %v646
        %v666 = vunpack.c.l.s4 1934713408
        %v667 = vunpack.c.0.s8 %v666
        %v668 = vlaneseq
        %v669 = vshrl.u32 %v668, 7
        %v670 = vsub.s32 %v667, %v669
        %v671 = vrot.slane %v663, %v670
        %v673 = vunpack.c.l.s4 1934713408
        %v674 = vunpack.c.0.s8 %v673
        %v675 = vlaneseq
        %v676 = vshrl.u32 %v675, 7
        %v677 = vsub.s32 %v674, %v676
        %v678 = vrot.slane %v664, %v677
        %v679 = vcombine.low %v654, %v662
        %v680 = vcombine.high %v654, %v662
        %v682 = vunpack.c.l.s4 1934713408
        %v683 = vunpack.c.0.s8 %v682
        %v684 = vlaneseq
        %v685 = vshrl.u32 %v684, 7
        %v686 = vsub.s32 %v683, %v685
        %v687 = vrot.slane %v679, %v686
        %v689 = vunpack.c.l.s4 1934713408
        %v690 = vunpack.c.0.s8 %v689
        %v691 = vlaneseq
        %v692 = vshrl.u32 %v691, 7
        %v693 = vsub.s32 %v690, %v692
        %v694 = vrot.slane %v680, %v693
        %v695 = vcombine.low %v671, %v687
        %v696 = vcombine.high %v671, %v687
        %v697 = vcombine.low %v678, %v694
        %v698 = vcombine.high %v678, %v694
        %v699 = vpack.c.bf16 %v695, %v695
        %v700 = vpack.c.bf16 %v696, %v696
        %v701 = vpack.c.bf16 %v697, %v697
        %v702 = vpack.c.bf16 %v698, %v698
        %v703 = vcombine.low %v523, %v530
        %v705 = vunpack.c.l.s4 1983009808
        %v706 = vunpack.c.0.s8 %v705
        %v707 = vlaneseq
        %v708 = vshrl.u32 %v707, 7
        %v709 = vsub.s32 %v706, %v708
        %v710 = vrot.slane %v703, %v709
        %v711 = vcombine.low %v547, %v548
        %v713 = vunpack.c.l.s4 1983009808
        %v714 = vunpack.c.0.s8 %v713
        %v715 = vlaneseq
        %v716 = vshrl.u32 %v715, 7
        %v717 = vsub.s32 %v714, %v716
        %v718 = vrot.slane %v711, %v717
        %v719 = vcombine.low %v539, %v546
        %v721 = vunpack.c.l.s4 1983009808
        %v722 = vunpack.c.0.s8 %v721
        %v723 = vlaneseq
        %v724 = vshrl.u32 %v723, 7
        %v725 = vsub.s32 %v722, %v724
        %v726 = vrot.slane %v719, %v725
        %v727 = vcombine.low %v549, %v550
        %v729 = vunpack.c.l.s4 1983009808
        %v730 = vunpack.c.0.s8 %v729
        %v731 = vlaneseq
        %v732 = vshrl.u32 %v731, 7
        %v733 = vsub.s32 %v730, %v732
        %v734 = vrot.slane %v727, %v733
        %v735 = vcombine.low %v710, %v718
        %v736 = vcombine.high %v710, %v718
        %v738 = vunpack.c.l.s4 1934713408
        %v739 = vunpack.c.0.s8 %v738
        %v740 = vlaneseq
        %v741 = vshrl.u32 %v740, 7
        %v742 = vsub.s32 %v739, %v741
        %v743 = vrot.slane %v735, %v742
        %v745 = vunpack.c.l.s4 1934713408
        %v746 = vunpack.c.0.s8 %v745
        %v747 = vlaneseq
        %v748 = vshrl.u32 %v747, 7
        %v749 = vsub.s32 %v746, %v748
        %v750 = vrot.slane %v736, %v749
        %v751 = vcombine.low %v726, %v734
        %v752 = vcombine.high %v726, %v734
        %v754 = vunpack.c.l.s4 1934713408
        %v755 = vunpack.c.0.s8 %v754
        %v756 = vlaneseq
        %v757 = vshrl.u32 %v756, 7
        %v758 = vsub.s32 %v755, %v757
        %v759 = vrot.slane %v751, %v758
        %v761 = vunpack.c.l.s4 1934713408
        %v762 = vunpack.c.0.s8 %v761
        %v763 = vlaneseq
        %v764 = vshrl.u32 %v763, 7
        %v765 = vsub.s32 %v762, %v764
        %v766 = vrot.slane %v752, %v765
        %v767 = vcombine.low %v743, %v759
        %v768 = vcombine.high %v743, %v759
        %v769 = vcombine.low %v750, %v766
        %v770 = vcombine.high %v750, %v766
        %v771 = vpack.c.bf16 %v767, %v767
        %v772 = vpack.c.bf16 %v768, %v768
        %v773 = vpack.c.bf16 %v769, %v769
        %v774 = vpack.c.bf16 %v770, %v770
        %v775 = vcombine.low %v603, %v610
        %v777 = vunpack.c.l.s4 1983009808
        %v778 = vunpack.c.0.s8 %v777
        %v779 = vlaneseq
        %v780 = vshrl.u32 %v779, 7
        %v781 = vsub.s32 %v778, %v780
        %v782 = vrot.slane %v775, %v781
        %v783 = vcombine.low %v627, %v628
        %v785 = vunpack.c.l.s4 1983009808
        %v786 = vunpack.c.0.s8 %v785
        %v787 = vlaneseq
        %v788 = vshrl.u32 %v787, 7
        %v789 = vsub.s32 %v786, %v788
        %v790 = vrot.slane %v783, %v789
        %v791 = vcombine.low %v619, %v626
        %v793 = vunpack.c.l.s4 1983009808
        %v794 = vunpack.c.0.s8 %v793
        %v795 = vlaneseq
        %v796 = vshrl.u32 %v795, 7
        %v797 = vsub.s32 %v794, %v796
        %v798 = vrot.slane %v791, %v797
        %v799 = vcombine.low %v629, %v630
        %v801 = vunpack.c.l.s4 1983009808
        %v802 = vunpack.c.0.s8 %v801
        %v803 = vlaneseq
        %v804 = vshrl.u32 %v803, 7
        %v805 = vsub.s32 %v802, %v804
        %v806 = vrot.slane %v799, %v805
        %v807 = vcombine.low %v782, %v790
        %v808 = vcombine.high %v782, %v790
        %v810 = vunpack.c.l.s4 1934713408
        %v811 = vunpack.c.0.s8 %v810
        %v812 = vlaneseq
        %v813 = vshrl.u32 %v812, 7
        %v814 = vsub.s32 %v811, %v813
        %v815 = vrot.slane %v807, %v814
        %v817 = vunpack.c.l.s4 1934713408
        %v818 = vunpack.c.0.s8 %v817
        %v819 = vlaneseq
        %v820 = vshrl.u32 %v819, 7
        %v821 = vsub.s32 %v818, %v820
        %v822 = vrot.slane %v808, %v821
        %v823 = vcombine.low %v798, %v806
        %v824 = vcombine.high %v798, %v806
        %v826 = vunpack.c.l.s4 1934713408
        %v827 = vunpack.c.0.s8 %v826
        %v828 = vlaneseq
        %v829 = vshrl.u32 %v828, 7
        %v830 = vsub.s32 %v827, %v829
        %v831 = vrot.slane %v823, %v830
        %v833 = vunpack.c.l.s4 1934713408
        %v834 = vunpack.c.0.s8 %v833
        %v835 = vlaneseq
        %v836 = vshrl.u32 %v835, 7
        %v837 = vsub.s32 %v834, %v836
        %v838 = vrot.slane %v824, %v837
        %v839 = vcombine.low %v815, %v831
        %v840 = vcombine.high %v815, %v831
        %v841 = vcombine.low %v822, %v838
        %v842 = vcombine.high %v822, %v838
        %v843 = vpack.c.bf16 %v839, %v839
        %v844 = vpack.c.bf16 %v840, %v840
        %v845 = vpack.c.bf16 %v841, %v841
        %v846 = vpack.c.bf16 %v842, %v842
        %vm847 = vcmask 64512
        %v849 = vsel %vm847, %v699, 0
        %v852 = vsel %vm847, %v771, 0
        %854 = vmatprep.subr.bf16.mxu0 0
        %855 = vmatpush1.bf16.xpose.msra.mxu0 0
        %856 = vmatprep.subr.bf16.mxu0 0
        %857 = vmatpush1.bf16.xpose.msra.mxu0 0
        %858 = vmatprep.subr.bf16.mxu0 0
        %859 = vmatpush1.bf16.xpose.msra.mxu0 0
        %860 = vmatprep.subr.bf16.mxu0 0
        %861 = vmatpush1.bf16.xpose.msra.mxu0 0
        %862 = vmatprep.subr.bf16.mxu0 0
        %863 = vmatpush1.bf16.xpose.msra.mxu0 0
        %864 = vmatprep.subr.bf16.mxu0 0
        %865 = vmatpush1.bf16.xpose.msra.mxu0 0
        %866 = vmatprep.subr.bf16.mxu0 0
        %867 = vmatpush1.bf16.xpose.msra.mxu0 0
        %868 = vmatprep.subr.bf16.mxu0 0
        %869 = vmatpush1.bf16.xpose.msra.mxu0 %v852
        %870 = vmatprep.subr.bf16.mxu0 0
        %871 = vmatpush2.bf16.xpose.msra.mxu0 0
        %872 = vmatprep.subr.bf16.mxu0 0
        %873 = vmatpush2.bf16.xpose.msra.mxu0 0
        %874 = vmatprep.subr.bf16.mxu0 0
        %875 = vmatpush2.bf16.xpose.msra.mxu0 0
        %876 = vmatprep.subr.bf16.mxu0 0
        %877 = vmatpush2.bf16.xpose.msra.mxu0 0
        %878 = vmatprep.subr.bf16.mxu0 0
        %879 = vmatpush2.bf16.xpose.msra.mxu0 0
        %880 = vmatprep.subr.bf16.mxu0 0
        %881 = vmatpush2.bf16.xpose.msra.mxu0 0
        %882 = vmatprep.subr.bf16.mxu0 0
        %883 = vmatpush2.bf16.xpose.msra.mxu0 0
        %884 = vmatprep.subr.bf16.mxu0 0
        %885 = vmatpush2.bf16.xpose.msra.mxu0 0
        %886 = vmatprep.mubr.bf16.mxu0 0
        %887 = vmatmul.mubr.bf16.gmra.mxu0 %v849
        %v888 = vpop.f32.mrf.mxu0
        %v889 = vadd.f32 0.0, %v888
        %v890 = vpop.f32.mrf.mxu0
        %v891 = vpop.f32.mrf.mxu0
        %v892 = vpop.f32.mrf.mxu0
        %893 = vdwg.mxu0
        %v895 = vsel %vm847, %v700, 0
        %v898 = vsel %vm847, %v772, 0
        %900 = vmatprep.subr.bf16.mxu0 0
        %901 = vmatpush1.bf16.xpose.msra.mxu0 0
        %902 = vmatprep.subr.bf16.mxu0 0
        %903 = vmatpush1.bf16.xpose.msra.mxu0 0
        %904 = vmatprep.subr.bf16.mxu0 0
        %905 = vmatpush1.bf16.xpose.msra.mxu0 0
        %906 = vmatprep.subr.bf16.mxu0 0
        %907 = vmatpush1.bf16.xpose.msra.mxu0 0
        %908 = vmatprep.subr.bf16.mxu0 0
        %909 = vmatpush1.bf16.xpose.msra.mxu0 0
        %910 = vmatprep.subr.bf16.mxu0 0
        %911 = vmatpush1.bf16.xpose.msra.mxu0 0
        %912 = vmatprep.subr.bf16.mxu0 0
        %913 = vmatpush1.bf16.xpose.msra.mxu0 0
        %914 = vmatprep.subr.bf16.mxu0 0
        %915 = vmatpush1.bf16.xpose.msra.mxu0 %v898
        %916 = vmatprep.subr.bf16.mxu0 0
        %917 = vmatpush2.bf16.xpose.msra.mxu0 0
        %918 = vmatprep.subr.bf16.mxu0 0
        %919 = vmatpush2.bf16.xpose.msra.mxu0 0
        %920 = vmatprep.subr.bf16.mxu0 0
        %921 = vmatpush2.bf16.xpose.msra.mxu0 0
        %922 = vmatprep.subr.bf16.mxu0 0
        %923 = vmatpush2.bf16.xpose.msra.mxu0 0
        %924 = vmatprep.subr.bf16.mxu0 0
        %925 = vmatpush2.bf16.xpose.msra.mxu0 0
        %926 = vmatprep.subr.bf16.mxu0 0
        %927 = vmatpush2.bf16.xpose.msra.mxu0 0
        %928 = vmatprep.subr.bf16.mxu0 0
        %929 = vmatpush2.bf16.xpose.msra.mxu0 0
        %930 = vmatprep.subr.bf16.mxu0 0
        %931 = vmatpush2.bf16.xpose.msra.mxu0 0
        %932 = vmatprep.mubr.bf16.mxu0 0
        %933 = vmatmul.mubr.bf16.gmra.mxu0 %v895
        %v934 = vpop.f32.mrf.mxu0
        %v935 = vadd.f32 0.0, %v934
        %v936 = vpop.f32.mrf.mxu0
        %v937 = vpop.f32.mrf.mxu0
        %v938 = vpop.f32.mrf.mxu0
        %939 = vdwg.mxu0
        %v941 = vsel %vm847, %v701, 0
        %v944 = vsel %vm847, %v773, 0
        %946 = vmatprep.subr.bf16.mxu0 0
        %947 = vmatpush1.bf16.xpose.msra.mxu0 0
        %948 = vmatprep.subr.bf16.mxu0 0
        %949 = vmatpush1.bf16.xpose.msra.mxu0 0
        %950 = vmatprep.subr.bf16.mxu0 0
        %951 = vmatpush1.bf16.xpose.msra.mxu0 0
        %952 = vmatprep.subr.bf16.mxu0 0
        %953 = vmatpush1.bf16.xpose.msra.mxu0 0
        %954 = vmatprep.subr.bf16.mxu0 0
        %955 = vmatpush1.bf16.xpose.msra.mxu0 0
        %956 = vmatprep.subr.bf16.mxu0 0
        %957 = vmatpush1.bf16.xpose.msra.mxu0 0
        %958 = vmatprep.subr.bf16.mxu0 0
        %959 = vmatpush1.bf16.xpose.msra.mxu0 0
        %960 = vmatprep.subr.bf16.mxu0 0
        %961 = vmatpush1.bf16.xpose.msra.mxu0 %v944
        %962 = vmatprep.subr.bf16.mxu0 0
        %963 = vmatpush2.bf16.xpose.msra.mxu0 0
        %964 = vmatprep.subr.bf16.mxu0 0
        %965 = vmatpush2.bf16.xpose.msra.mxu0 0
        %966 = vmatprep.subr.bf16.mxu0 0
        %967 = vmatpush2.bf16.xpose.msra.mxu0 0
        %968 = vmatprep.subr.bf16.mxu0 0
        %969 = vmatpush2.bf16.xpose.msra.mxu0 0
        %970 = vmatprep.subr.bf16.mxu0 0
        %971 = vmatpush2.bf16.xpose.msra.mxu0 0
        %972 = vmatprep.subr.bf16.mxu0 0
        %973 = vmatpush2.bf16.xpose.msra.mxu0 0
        %974 = vmatprep.subr.bf16.mxu0 0
        %975 = vmatpush2.bf16.xpose.msra.mxu0 0
        %976 = vmatprep.subr.bf16.mxu0 0
        %977 = vmatpush2.bf16.xpose.msra.mxu0 0
        %978 = vmatprep.mubr.bf16.mxu0 0
        %979 = vmatmul.mubr.bf16.gmra.mxu0 %v941
        %v980 = vpop.f32.mrf.mxu0
        %v981 = vadd.f32 0.0, %v980
        %v982 = vpop.f32.mrf.mxu0
        %v983 = vpop.f32.mrf.mxu0
        %v984 = vpop.f32.mrf.mxu0
        %985 = vdwg.mxu0
        %v987 = vsel %vm847, %v702, 0
        %v990 = vsel %vm847, %v774, 0
        %992 = vmatprep.subr.bf16.mxu0 0
        %993 = vmatpush1.bf16.xpose.msra.mxu0 0
        %994 = vmatprep.subr.bf16.mxu0 0
        %995 = vmatpush1.bf16.xpose.msra.mxu0 0
        %996 = vmatprep.subr.bf16.mxu0 0
        %997 = vmatpush1.bf16.xpose.msra.mxu0 0
        %998 = vmatprep.subr.bf16.mxu0 0
        %999 = vmatpush1.bf16.xpose.msra.mxu0 0
        %1000 = vmatprep.subr.bf16.mxu0 0
        %1001 = vmatpush1.bf16.xpose.msra.mxu0 0
        %1002 = vmatprep.subr.bf16.mxu0 0
        %1003 = vmatpush1.bf16.xpose.msra.mxu0 0
        %1004 = vmatprep.subr.bf16.mxu0 0
        %1005 = vmatpush1.bf16.xpose.msra.mxu0 0
        %1006 = vmatprep.subr.bf16.mxu0 0
        %1007 = vmatpush1.bf16.xpose.msra.mxu0 %v990
        %1008 = vmatprep.subr.bf16.mxu0 0
        %1009 = vmatpush2.bf16.xpose.msra.mxu0 0
        %1010 = vmatprep.subr.bf16.mxu0 0
        %1011 = vmatpush2.bf16.xpose.msra.mxu0 0
        %1012 = vmatprep.subr.bf16.mxu0 0
        %1013 = vmatpush2.bf16.xpose.msra.mxu0 0
        %1014 = vmatprep.subr.bf16.mxu0 0
        %1015 = vmatpush2.bf16.xpose.msra.mxu0 0
        %1016 = vmatprep.subr.bf16.mxu0 0
        %1017 = vmatpush2.bf16.xpose.msra.mxu0 0
        %1018 = vmatprep.subr.bf16.mxu0 0
        %1019 = vmatpush2.bf16.xpose.msra.mxu0 0
        %1020 = vmatprep.subr.bf16.mxu0 0
        %1021 = vmatpush2.bf16.xpose.msra.mxu0 0
        %1022 = vmatprep.subr.bf16.mxu0 0
        %1023 = vmatpush2.bf16.xpose.msra.mxu0 0
        %1024 = vmatprep.mubr.bf16.mxu0 0
        %1025 = vmatmul.mubr.bf16.gmra.mxu0 %v987
        %v1026 = vpop.f32.mrf.mxu0
        %v1027 = vadd.f32 0.0, %v1026
        %v1028 = vpop.f32.mrf.mxu0
        %v1029 = vpop.f32.mrf.mxu0
        %v1030 = vpop.f32.mrf.mxu0
        %1031 = vdwg.mxu0
        %v1032 = vmul.f32 %v889, 0.35355338
        %v1033 = vmul.f32 %v935, 0.35355338
        %v1034 = vmul.f32 %v981, 0.35355338
        %v1035 = vmul.f32 %v1027, 0.35355338
        %v1036 = vsel %vm847, %v1032, -inf
        %1037 = vmax.xlane.f32.xlu0 %v1036
        %v1038 = vpop.xlane.xlu0 %1037
        %v1039 = vsel %vm847, %v1033, -inf
        %1040 = vmax.xlane.f32.xlu0 %v1039
        %v1041 = vpop.xlane.xlu0 %1040
        %v1042 = vsel %vm847, %v1034, -inf
        %1043 = vmax.xlane.f32.xlu0 %v1042
        %v1044 = vpop.xlane.xlu0 %1043
        %v1045 = vsel %vm847, %v1035, -inf
        %1046 = vmax.xlane.f32.xlu0 %v1045
        %v1047 = vpop.xlane.xlu0 %1046
        %v1048 = vsub.f32 %v1032, %v1038
        %v1049 = vsub.f32 %v1033, %v1041
        %v1050 = vsub.f32 %v1034, %v1044
        %v1051 = vsub.f32 %v1035, %v1047
        %v1052 = vmul.f32 %v1048, 1.442695
        %v1053 = vpow.pop %v1052
        %v1054 = vmul.f32 %v1049, 1.442695
        %v1055 = vpow.pop %v1054
        %v1056 = vmul.f32 %v1050, 1.442695
        %v1057 = vpow.pop %v1056
        %v1058 = vmul.f32 %v1051, 1.442695
        %v1059 = vpow.pop %v1058
        %v1060 = vsel %vm847, %v1053, 0.0
        %1061 = vadd.xlane.f32.xlu0 %v1060
        %v1062 = vpop.xlane.xlu0 %1061
        %v1063 = vsel %vm847, %v1055, 0.0
        %1064 = vadd.xlane.f32.xlu0 %v1063
        %v1065 = vpop.xlane.xlu0 %1064
        %v1066 = vsel %vm847, %v1057, 0.0
        %1067 = vadd.xlane.f32.xlu0 %v1066
        %v1068 = vpop.xlane.xlu0 %1067
        %v1069 = vsel %vm847, %v1059, 0.0
        %1070 = vadd.xlane.f32.xlu0 %v1069
        %v1071 = vpop.xlane.xlu0 %1070
        %v1072 = vrcp.pop %v1062
        %v1073 = vrcp.pop %v1065
        %v1074 = vrcp.pop %v1068
        %v1075 = vrcp.pop %v1071
        %v1076 = vmul.f32 %v1053, %v1072
        %v1077 = vmul.f32 %v1055, %v1073
        %v1078 = vmul.f32 %v1057, %v1074
        %v1079 = vmul.f32 %v1059, %v1075
        %v1080 = vpack.c.bf16 %v1076, %v1076
        %v1081 = vpack.c.bf16 %v1077, %v1077
        %v1082 = vpack.c.bf16 %v1078, %v1078
        %v1083 = vpack.c.bf16 %v1079, %v1079
        %v1085 = vsel %vm847, %v1080, 0
        %vm1087 = vcmask 1043456
        %v1089 = vsel %vm1087, %v843, 0
        %1091 = vmatprep.subr.bf16.mxu0 0
        %1092 = vmatpush1.bf16.msra.mxu0 0
        %1093 = vmatprep.subr.bf16.mxu0 0
        %1094 = vmatpush1.bf16.msra.mxu0 0
        %1095 = vmatprep.subr.bf16.mxu0 0
        %1096 = vmatpush1.bf16.msra.mxu0 0
        %1097 = vmatprep.subr.bf16.mxu0 0
        %1098 = vmatpush1.bf16.msra.mxu0 0
        %1099 = vmatprep.subr.bf16.mxu0 0
        %1100 = vmatpush1.bf16.msra.mxu0 0
        %1101 = vmatprep.subr.bf16.mxu0 0
        %1102 = vmatpush1.bf16.msra.mxu0 0
        %1103 = vmatprep.subr.bf16.mxu0 0
        %1104 = vmatpush1.bf16.msra.mxu0 0
        %1105 = vmatprep.subr.bf16.mxu0 0
        %1106 = vmatpush1.bf16.msra.mxu0 %v1089
        %1107 = vmatprep.subr.bf16.mxu0 0
        %1108 = vmatpush2.bf16.msra.mxu0 0
        %1109 = vmatprep.subr.bf16.mxu0 0
        %1110 = vmatpush2.bf16.msra.mxu0 0
        %1111 = vmatprep.subr.bf16.mxu0 0
        %1112 = vmatpush2.bf16.msra.mxu0 0
        %1113 = vmatprep.subr.bf16.mxu0 0
        %1114 = vmatpush2.bf16.msra.mxu0 0
        %1115 = vmatprep.subr.bf16.mxu0 0
        %1116 = vmatpush2.bf16.msra.mxu0 0
        %1117 = vmatprep.subr.bf16.mxu0 0
        %1118 = vmatpush2.bf16.msra.mxu0 0
        %1119 = vmatprep.subr.bf16.mxu0 0
        %1120 = vmatpush2.bf16.msra.mxu0 0
        %1121 = vmatprep.subr.bf16.mxu0 0
        %1122 = vmatpush2.bf16.msra.mxu0 0
        %1123 = vmatprep.mubr.bf16.mxu0 0
        %1124 = vmatmul.mubr.bf16.gmra.mxu0 %v1085
        %v1125 = vpop.f32.mrf.mxu0
        %v1126 = vadd.f32 0.0, %v1125
        %v1127 = vpop.f32.mrf.mxu0
        %v1128 = vpop.f32.mrf.mxu0
        %v1129 = vpop.f32.mrf.mxu0
        %1130 = vdwg.mxu0
        %v1132 = vsel %vm847, %v1081, 0
        %v1135 = vsel %vm1087, %v844, 0
        %1137 = vmatprep.subr.bf16.mxu0 0
        %1138 = vmatpush1.bf16.msra.mxu0 0
        %1139 = vmatprep.subr.bf16.mxu0 0
        %1140 = vmatpush1.bf16.msra.mxu0 0
        %1141 = vmatprep.subr.bf16.mxu0 0
        %1142 = vmatpush1.bf16.msra.mxu0 0
        %1143 = vmatprep.subr.bf16.mxu0 0
        %1144 = vmatpush1.bf16.msra.mxu0 0
        %1145 = vmatprep.subr.bf16.mxu0 0
        %1146 = vmatpush1.bf16.msra.mxu0 0
        %1147 = vmatprep.subr.bf16.mxu0 0
        %1148 = vmatpush1.bf16.msra.mxu0 0
        %1149 = vmatprep.subr.bf16.mxu0 0
        %1150 = vmatpush1.bf16.msra.mxu0 0
        %1151 = vmatprep.subr.bf16.mxu0 0
        %1152 = vmatpush1.bf16.msra.mxu0 %v1135
        %1153 = vmatprep.subr.bf16.mxu0 0
        %1154 = vmatpush2.bf16.msra.mxu0 0
        %1155 = vmatprep.subr.bf16.mxu0 0
        %1156 = vmatpush2.bf16.msra.mxu0 0
        %1157 = vmatprep.subr.bf16.mxu0 0
        %1158 = vmatpush2.bf16.msra.mxu0 0
        %1159 = vmatprep.subr.bf16.mxu0 0
        %1160 = vmatpush2.bf16.msra.mxu0 0
        %1161 = vmatprep.subr.bf16.mxu0 0
        %1162 = vmatpush2.bf16.msra.mxu0 0
        %1163 = vmatprep.subr.bf16.mxu0 0
        %1164 = vmatpush2.bf16.msra.mxu0 0
        %1165 = vmatprep.subr.bf16.mxu0 0
        %1166 = vmatpush2.bf16.msra.mxu0 0
        %1167 = vmatprep.subr.bf16.mxu0 0
        %1168 = vmatpush2.bf16.msra.mxu0 0
        %1169 = vmatprep.mubr.bf16.mxu0 0
        %1170 = vmatmul.mubr.bf16.gmra.mxu0 %v1132
        %v1171 = vpop.f32.mrf.mxu0
        %v1172 = vadd.f32 0.0, %v1171
        %v1173 = vpop.f32.mrf.mxu0
        %v1174 = vpop.f32.mrf.mxu0
        %v1175 = vpop.f32.mrf.mxu0
        %1176 = vdwg.mxu0
        %v1178 = vsel %vm847, %v1082, 0
        %v1181 = vsel %vm1087, %v845, 0
        %1183 = vmatprep.subr.bf16.mxu0 0
        %1184 = vmatpush1.bf16.msra.mxu0 0
        %1185 = vmatprep.subr.bf16.mxu0 0
        %1186 = vmatpush1.bf16.msra.mxu0 0
        %1187 = vmatprep.subr.bf16.mxu0 0
        %1188 = vmatpush1.bf16.msra.mxu0 0
        %1189 = vmatprep.subr.bf16.mxu0 0
        %1190 = vmatpush1.bf16.msra.mxu0 0
        %1191 = vmatprep.subr.bf16.mxu0 0
        %1192 = vmatpush1.bf16.msra.mxu0 0
        %1193 = vmatprep.subr.bf16.mxu0 0
        %1194 = vmatpush1.bf16.msra.mxu0 0
        %1195 = vmatprep.subr.bf16.mxu0 0
        %1196 = vmatpush1.bf16.msra.mxu0 0
        %1197 = vmatprep.subr.bf16.mxu0 0
        %1198 = vmatpush1.bf16.msra.mxu0 %v1181
        %1199 = vmatprep.subr.bf16.mxu0 0
        %1200 = vmatpush2.bf16.msra.mxu0 0
        %1201 = vmatprep.subr.bf16.mxu0 0
        %1202 = vmatpush2.bf16.msra.mxu0 0
        %1203 = vmatprep.subr.bf16.mxu0 0
        %1204 = vmatpush2.bf16.msra.mxu0 0
        %1205 = vmatprep.subr.bf16.mxu0 0
        %1206 = vmatpush2.bf16.msra.mxu0 0
        %1207 = vmatprep.subr.bf16.mxu0 0
        %1208 = vmatpush2.bf16.msra.mxu0 0
        %1209 = vmatprep.subr.bf16.mxu0 0
        %1210 = vmatpush2.bf16.msra.mxu0 0
        %1211 = vmatprep.subr.bf16.mxu0 0
        %1212 = vmatpush2.bf16.msra.mxu0 0
        %1213 = vmatprep.subr.bf16.mxu0 0
        %1214 = vmatpush2.bf16.msra.mxu0 0
        %1215 = vmatprep.mubr.bf16.mxu0 0
        %1216 = vmatmul.mubr.bf16.gmra.mxu0 %v1178
        %v1217 = vpop.f32.mrf.mxu0
        %v1218 = vadd.f32 0.0, %v1217
        %v1219 = vpop.f32.mrf.mxu0
        %v1220 = vpop.f32.mrf.mxu0
        %v1221 = vpop.f32.mrf.mxu0
        %1222 = vdwg.mxu0
        %v1224 = vsel %vm847, %v1083, 0
        %v1227 = vsel %vm1087, %v846, 0
        %1229 = vmatprep.subr.bf16.mxu0 0
        %1230 = vmatpush1.bf16.msra.mxu0 0
        %1231 = vmatprep.subr.bf16.mxu0 0
        %1232 = vmatpush1.bf16.msra.mxu0 0
        %1233 = vmatprep.subr.bf16.mxu0 0
        %1234 = vmatpush1.bf16.msra.mxu0 0
        %1235 = vmatprep.subr.bf16.mxu0 0
        %1236 = vmatpush1.bf16.msra.mxu0 0
        %1237 = vmatprep.subr.bf16.mxu0 0
        %1238 = vmatpush1.bf16.msra.mxu0 0
        %1239 = vmatprep.subr.bf16.mxu0 0
        %1240 = vmatpush1.bf16.msra.mxu0 0
        %1241 = vmatprep.subr.bf16.mxu0 0
        %1242 = vmatpush1.bf16.msra.mxu0 0
        %1243 = vmatprep.subr.bf16.mxu0 0
        %1244 = vmatpush1.bf16.msra.mxu0 %v1227
        %1245 = vmatprep.subr.bf16.mxu0 0
        %1246 = vmatpush2.bf16.msra.mxu0 0
        %1247 = vmatprep.subr.bf16.mxu0 0
        %1248 = vmatpush2.bf16.msra.mxu0 0
        %1249 = vmatprep.subr.bf16.mxu0 0
        %1250 = vmatpush2.bf16.msra.mxu0 0
        %1251 = vmatprep.subr.bf16.mxu0 0
        %1252 = vmatpush2.bf16.msra.mxu0 0
        %1253 = vmatprep.subr.bf16.mxu0 0
        %1254 = vmatpush2.bf16.msra.mxu0 0
        %1255 = vmatprep.subr.bf16.mxu0 0
        %1256 = vmatpush2.bf16.msra.mxu0 0
        %1257 = vmatprep.subr.bf16.mxu0 0
        %1258 = vmatpush2.bf16.msra.mxu0 0
        %1259 = vmatprep.subr.bf16.mxu0 0
        %1260 = vmatpush2.bf16.msra.mxu0 0
        %1261 = vmatprep.mubr.bf16.mxu0 0
        %1262 = vmatmul.mubr.bf16.gmra.mxu0 %v1224
        %v1263 = vpop.f32.mrf.mxu0
        %v1264 = vadd.f32 0.0, %v1263
        %v1265 = vpop.f32.mrf.mxu0
        %v1266 = vpop.f32.mrf.mxu0
        %v1267 = vpop.f32.mrf.mxu0
        %1268 = vdwg.mxu0
        %v1269 = vcombine.low %v1126, %v1218
        %v1270 = vcombine.high %v1126, %v1218
        %v1272 = vunpack.c.l.s4 1983009808
        %v1273 = vunpack.c.0.s8 %v1272
        %v1274 = vlaneseq
        %v1275 = vshrl.u32 %v1274, 7
        %v1276 = vsub.s32 %v1273, %v1275
        %v1277 = vrot.slane %v1269, %v1276
        %v1279 = vunpack.c.l.s4 1983009808
        %v1280 = vunpack.c.0.s8 %v1279
        %v1281 = vlaneseq
        %v1282 = vshrl.u32 %v1281, 7
        %v1283 = vsub.s32 %v1280, %v1282
        %v1284 = vrot.slane %v1270, %v1283
        %v1285 = vcombine.low %v1172, %v1264
        %v1286 = vcombine.high %v1172, %v1264
        %v1288 = vunpack.c.l.s4 1983009808
        %v1289 = vunpack.c.0.s8 %v1288
        %v1290 = vlaneseq
        %v1291 = vshrl.u32 %v1290, 7
        %v1292 = vsub.s32 %v1289, %v1291
        %v1293 = vrot.slane %v1285, %v1292
        %v1295 = vunpack.c.l.s4 1983009808
        %v1296 = vunpack.c.0.s8 %v1295
        %v1297 = vlaneseq
        %v1298 = vshrl.u32 %v1297, 7
        %v1299 = vsub.s32 %v1296, %v1298
        %v1300 = vrot.slane %v1286, %v1299
        %v1301 = vcombine.low %v1277, %v1293
        %v1302 = vcombine.high %v1277, %v1293
        %v1304 = vunpack.c.l.s4 1934713408
        %v1305 = vunpack.c.0.s8 %v1304
        %v1306 = vlaneseq
        %v1307 = vshrl.u32 %v1306, 7
        %v1308 = vsub.s32 %v1305, %v1307
        %v1309 = vrot.slane %v1301, %v1308
        %v1311 = vunpack.c.l.s4 1934713408
        %v1312 = vunpack.c.0.s8 %v1311
        %v1313 = vlaneseq
        %v1314 = vshrl.u32 %v1313, 7
        %v1315 = vsub.s32 %v1312, %v1314
        %v1316 = vrot.slane %v1302, %v1315
        %v1317 = vcombine.low %v1284, %v1300
        %v1318 = vcombine.high %v1284, %v1300
        %v1320 = vunpack.c.l.s4 1934713408
        %v1321 = vunpack.c.0.s8 %v1320
        %v1322 = vlaneseq
        %v1323 = vshrl.u32 %v1322, 7
        %v1324 = vsub.s32 %v1321, %v1323
        %v1325 = vrot.slane %v1317, %v1324
        %v1327 = vunpack.c.l.s4 1934713408
        %v1328 = vunpack.c.0.s8 %v1327
        %v1329 = vlaneseq
        %v1330 = vshrl.u32 %v1329, 7
        %v1331 = vsub.s32 %v1328, %v1330
        %v1332 = vrot.slane %v1318, %v1331
        %v1333 = vcombine.high %v1309, 0.0
        %v1334 = vcombine.high %v1316, 0.0
        %v1335 = vcombine.high %v1325, 0.0
        %v1336 = vcombine.high %v1332, 0.0
        %v1337 = vcombine.low %v1309, %v1316
        %v1339 = vunpack.c.l.s4 1983009808
        %v1340 = vunpack.c.0.s8 %v1339
        %v1341 = vlaneseq
        %v1342 = vshrl.u32 %v1341, 7
        %v1343 = vsub.s32 %v1340, %v1342
        %v1344 = vrot.slane %v1337, %v1343
        %v1345 = vcombine.low %v1333, %v1334
        %v1347 = vunpack.c.l.s4 1983009808
        %v1348 = vunpack.c.0.s8 %v1347
        %v1349 = vlaneseq
        %v1350 = vshrl.u32 %v1349, 7
        %v1351 = vsub.s32 %v1348, %v1350
        %v1352 = vrot.slane %v1345, %v1351
        %v1353 = vcombine.low %v1325, %v1332
        %v1355 = vunpack.c.l.s4 1983009808
        %v1356 = vunpack.c.0.s8 %v1355
        %v1357 = vlaneseq
        %v1358 = vshrl.u32 %v1357, 7
        %v1359 = vsub.s32 %v1356, %v1358
        %v1360 = vrot.slane %v1353, %v1359
        %v1361 = vcombine.low %v1335, %v1336
        %v1363 = vunpack.c.l.s4 1983009808
        %v1364 = vunpack.c.0.s8 %v1363
        %v1365 = vlaneseq
        %v1366 = vshrl.u32 %v1365, 7
        %v1367 = vsub.s32 %v1364, %v1366
        %v1368 = vrot.slane %v1361, %v1367
        %v1369 = vcombine.low %v1344, %v1352
        %v1370 = vcombine.high %v1344, %v1352
        %v1372 = vunpack.c.l.s4 1934713408
        %v1373 = vunpack.c.0.s8 %v1372
        %v1374 = vlaneseq
        %v1375 = vshrl.u32 %v1374, 7
        %v1376 = vsub.s32 %v1373, %v1375
        %v1377 = vrot.slane %v1369, %v1376
        %v1379 = vunpack.c.l.s4 1934713408
        %v1380 = vunpack.c.0.s8 %v1379
        %v1381 = vlaneseq
        %v1382 = vshrl.u32 %v1381, 7
        %v1383 = vsub.s32 %v1380, %v1382
        %v1384 = vrot.slane %v1370, %v1383
        %v1385 = vcombine.low %v1360, %v1368
        %v1386 = vcombine.high %v1360, %v1368
        %v1388 = vunpack.c.l.s4 1934713408
        %v1389 = vunpack.c.0.s8 %v1388
        %v1390 = vlaneseq
        %v1391 = vshrl.u32 %v1390, 7
        %v1392 = vsub.s32 %v1389, %v1391
        %v1393 = vrot.slane %v1385, %v1392
        %v1395 = vunpack.c.l.s4 1934713408
        %v1396 = vunpack.c.0.s8 %v1395
        %v1397 = vlaneseq
        %v1398 = vshrl.u32 %v1397, 7
        %v1399 = vsub.s32 %v1396, %v1398
        %v1400 = vrot.slane %v1386, %v1399
        %v1401 = vcombine.low %v1377, %v1393
        %v1402 = vcombine.high %v1377, %v1393
        %v1403 = vcombine.low %v1384, %v1400
        %v1404 = vcombine.high %v1384, %v1400
        %1406 = vrot.lane.b32.xlu0 %v1402, 8
        %v1407 = vpop.permute.xlu0 %1406
        %1410 = vrot.lane.b32.xlu0 %v1403, 16
        %v1411 = vpop.permute.xlu0 %1410
        %1414 = vrot.lane.b32.xlu0 %v1404, 24
        %v1415 = vpop.permute.xlu0 %1414
        %v1417 = vsel %vm847, %v1401, %v1407
        %vm1418 = vcmask 130048
        %v1419 = vsel %vm1418, %v1417, %v1411
        %vm1420 = vcmask 195584
        %v1421 = vsel %vm1420, %v1419, %v1415
        %v1422 = vpack.c.bf16 %v1421, %v1421
        %v1423 = vld [vmem:[#allocation7] sm:$0xf]
        %v1424 = vld [vmem:[#allocation7 + $0x4] sm:$0xf]
        %v1425 = vld [vmem:[#allocation7 + $0x8] sm:$0xf]
        %v1426 = vld [vmem:[#allocation7 + $0xc] sm:$0xf]
        %v1427 = vld [vmem:[%s4] sm:$0x1]
        %v1429 = vlaneseq
        %v1430 = vshrl.u32 %v1429, 7
        %v1431 = vsub.s32 0, %v1430
        %v1432 = vrot.slane %v1427, %v1431
        %v1438 = vunpack.c.l.b16 %v1423
        %v1439 = vunpack.c.l.b16 %v1424
        %v1440 = vunpack.c.l.b16 %v1425
        %v1441 = vunpack.c.l.b16 %v1426
        %v1442 = vpack.c.b16 %v1439, %v1438
        %v1443 = vpack.c.b16 %v1441, %v1440
        %v1447 = vsel %vm349, %v1422, 0
        %1449 = vmatprep.subr.bf16.mxu0 0
        %1450 = vmatpush1.bf16.msra.mxu0 0
        %1451 = vmatprep.subr.bf16.mxu0 0
        %1452 = vmatpush1.bf16.msra.mxu0 0
        %1453 = vmatprep.subr.bf16.mxu0 0
        %1454 = vmatpush1.bf16.msra.mxu0 0
        %1455 = vmatprep.subr.bf16.mxu0 0
        %1456 = vmatpush1.bf16.msra.mxu0 0
        %1457 = vmatprep.subr.bf16.mxu0 0
        %1458 = vmatpush1.bf16.msra.mxu0 0
        %1459 = vmatprep.subr.bf16.mxu0 0
        %1460 = vmatpush1.bf16.msra.mxu0 0
        %1461 = vmatprep.subr.bf16.mxu0 0
        %1462 = vmatpush1.bf16.msra.mxu0 %v1443
        %1463 = vmatprep.subr.bf16.mxu0 0
        %1464 = vmatpush1.bf16.msra.mxu0 %v1442
        %1465 = vmatprep.subr.bf16.mxu0 0
        %1466 = vmatpush2.bf16.msra.mxu0 0
        %1467 = vmatprep.subr.bf16.mxu0 0
        %1468 = vmatpush2.bf16.msra.mxu0 0
        %1469 = vmatprep.subr.bf16.mxu0 0
        %1470 = vmatpush2.bf16.msra.mxu0 0
        %1471 = vmatprep.subr.bf16.mxu0 0
        %1472 = vmatpush2.bf16.msra.mxu0 0
        %1473 = vmatprep.subr.bf16.mxu0 0
        %1474 = vmatpush2.bf16.msra.mxu0 0
        %1475 = vmatprep.subr.bf16.mxu0 0
        %1476 = vmatpush2.bf16.msra.mxu0 0
        %1477 = vmatprep.subr.bf16.mxu0 0
        %1478 = vmatpush2.bf16.msra.mxu0 0
        %1479 = vmatprep.subr.bf16.mxu0 0
        %1480 = vmatpush2.bf16.msra.mxu0 0
        %1481 = vmatprep.mubr.bf16.mxu0 0
        %1482 = vmatmul.mubr.bf16.gmra.mxu0 %v1447
        %v1483 = vpop.f32.mrf.mxu0
        %v1484 = vadd.f32 %v1432, %v1483
        %v1485 = vpop.f32.mrf.mxu0
        %v1486 = vpop.f32.mrf.mxu0
        %v1487 = vpop.f32.mrf.mxu0
        %1488 = vdwg.mxu0
        %v1489 = vadd.f32 %v1484, %v324
        %v1490 = vld [vmem:[%s5] sm:$0x1]
        %v1491 = vld [vmem:[%s6] sm:$0x1]
        %v1492 = vsel %vm349, %v1489, 0.0
        %1493 = vadd.xlane.f32.xlu0 %v1492
        %v1494 = vpop.xlane.xlu0 %1493
        %v1495 = vrcp.pop 32.0
        %v1496 = vmul.f32 %v1494, %v1495
        %v1497 = vsub.f32 %v1489, %v1496
        %v1498 = vmul.f32 %v1497, %v1497
        %v1499 = vsel %vm349, %v1498, 0.0
        %1500 = vadd.xlane.f32.xlu0 %v1499
        %v1501 = vpop.xlane.xlu0 %1500
        %v1502 = vmul.f32 %v1501, %v1495
        %v1503 = vadd.f32 %v1502, 1e-05
        %v1504 = vrsqrt.pop %v1503
        %v1505 = vmul.f32 %v1497, %v1504
        %v1507 = vlaneseq
        %v1508 = vshrl.u32 %v1507, 7
        %v1509 = vsub.s32 0, %v1508
        %v1510 = vrot.slane %v1490, %v1509
        %v1512 = vmul.f32 %v1505, %v1510
        %v1514 = vlaneseq
        %v1515 = vshrl.u32 %v1514, 7
        %v1516 = vsub.s32 0, %v1515
        %v1517 = vrot.slane %v1491, %v1516
        %v1519 = vadd.f32 %v1512, %v1517
        %1520 = vst.msk [vmem:[%s322] sm:$0xff] %vm349, %v1519
        %s1521 = sand.u32 %s185, 1
        %s1522 = scalar_lea.sflag [#allocation4], %s1521
        %s1523 = sand.u32 %s185, 1
        %s1524 = smul.addr %s1523, 8
        %s1525 = scalar_lea.vmem [#allocation8], %s1524
        // Predicated region
        $region61: #{tpu_custom_call.1} parent=47 // pred_check
          %p1526 = pneg %p195
        $region62: #{tpu_custom_call.1} parent=47 // pred_check_branch
          %1528 = sbr.rel (%p1526) target = $region64
        $region63: #{tpu_custom_call.1} parent=47 // pred_region
          %s1530 = ssub.s32 128, 128
          %1531 = vsyncadd %s1522, %s1530
          %s1532 = smul.addr %s25, 128
          %s1533 = scalar_lea.hbm %s7, %s1532
          %s1535 = sshll.u32 %s1525, 4
          %s1536 = int_to_ptr.vmem [resolvable:$true] %s1535
          %1538 = dma.vmem_to_hbm [thread:$0]  %s1536, 128, %s1533, %s1522
        $region64: #{tpu_custom_call.1} parent=47 // pred_fallthru
          _
      $region48: #{tpu_custom_call.1} parent=5 // pred_fallthru
        _
      %p1539 = scmp.le.s32.totalorder 2, %s20
      // Predicated region
      $region65: #{tpu_custom_call.1} parent=5 // pred_check
        %p1540 = pneg %p1539
      $region66: #{tpu_custom_call.1} parent=5 // pred_check_branch
        %1542 = sbr.rel (%p1540) target = $region68
      $region67: #{tpu_custom_call.1} parent=5 // pred_region
        %s1543 = ssub.s32 %s20, 2
        // Predicated region
        $region69: #{tpu_custom_call.1} parent=67 // pred_check
          %p1544 = pneg %p201
        $region70: #{tpu_custom_call.1} parent=67 // pred_check_branch
          %1546 = sbr.rel (%p1544) target = $region72
        $region71: #{tpu_custom_call.1} parent=67 // pred_region
          %s1547 = sand.u32 %s186, 1
          %s1548 = scalar_lea.sflag [#allocation4], %s1547
          %s1549 = sand.u32 %s186, 1
          %s1550 = smul.addr %s1549, 8
          %s1551 = scalar_lea.vmem [#allocation8], %s1550
          %1552 = dma.done %s1548, 128
        $region72: #{tpu_custom_call.1} parent=67 // pred_fallthru
          _
      $region68: #{tpu_custom_call.1} parent=5 // pred_fallthru
        _
    $region6: #{tpu_custom_call.1} parent=1 // loop_footer
      %s24 = sadd.s32 1, %s20
    $region7: #{tpu_custom_call.1} parent=1 // loop_footer_branch
      %19 = sbr.rel target = $region3
    $region8: #{tpu_custom_call.1} parent=1 // loop_exit
      _
    %1553 = vsyncpa [#allocation3], 1
    %s1554 = scalar_lea.sflag [#allocation3], 1
    %1555 = vsyncpa %s1554, 1
    %1556 = vsyncpa [#allocation6], 1
    %1557 = vsyncpa [#allocation4], 1
    %s1558 = scalar_lea.sflag [#allocation4], 1
    %1559 = vsyncpa %s1558, 1

</llo_original>
